<compile_context>
chip_gen: v5e
topology: v5e:2x2
jax: 0.10.0
libtpu: 0.0.40
codegen_flags: <defaults>
</compile_context>

<pallas_src>
import functools

import jax
import jax.numpy as jnp
from jax.experimental import pallas as pl
from jax.experimental.pallas import tpu as pltpu

BN_EPS = 1e-5


def _scatter_kernel(batch_ref, x_ref, sums_ref, counts_ref, *,
                    tile_n, n_nodes, tiles_per_split):
    """Grid step: scatter-add one node tile into this split's partial sums."""
    s = pl.program_id(0)          # parallel split (maps to a TensorCore on v7x)
    t = pl.program_id(1)          # node-tile index within the split (reduction)

    @pl.when(t == 0)
    def _():
        sums_ref[...] = jnp.zeros_like(sums_ref)
        counts_ref[...] = jnp.zeros_like(counts_ref)

    g = s * tiles_per_split + t                       # unclamped global tile id
    base = g * tile_n
    n_graphs = sums_ref.shape[0]

    # One-hot scatter matrix, masked so that (a) phantom tiles (grid padding of
    # the parallel split, clamped onto the last real block by the index_map)
    # and (b) the ragged tail of the last real tile contribute nothing.
    batch = batch_ref[...]                                          # [1, tile_n]
    col_ids = jax.lax.broadcasted_iota(jnp.int32, (1, tile_n), 1)
    col_valid = (base + col_ids) < n_nodes                          # [1, tile_n]
    row_ids = jax.lax.broadcasted_iota(jnp.int32, (n_graphs, tile_n), 0)
    hit = (row_ids == batch) & col_valid                            # [B, tile_n]

    # Exact per-graph counts: f32 lane reduce of the 0/1 mask (XLU slot).
    counts_ref[...] += jnp.sum(hit.astype(jnp.float32), axis=1, keepdims=True)

    # Zero OOB rows of x before the matmul (garbage could be NaN; 0*NaN = NaN).
    x_t = x_ref[...]                                                # [tile_n, Fx]
    row_pos = base + jax.lax.broadcasted_iota(jnp.int32, (tile_n, 1), 0)
    x_m = jnp.where(row_pos < n_nodes, x_t, jnp.zeros_like(x_t))

    # Scatter-add on the MXU; accumulate in f32 (x may be bf16).
    onehot = hit.astype(x_t.dtype)
    sums_ref[...] += jnp.dot(onehot, x_m, preferred_element_type=jnp.float32)


def _mlp_kernel(psums_ref, pcounts_ref, u_ref, w1_ref, w23_ref,
                vec1_ref, vec2_ref, out_ref, *, slope, n_x, n_u):
    """Grid-less epilogue: combine partials, scatter-mean, BN/Linear/LeakyReLU x3."""
    sums = jnp.sum(psums_ref[...], axis=0)            # [B, Fx]
    counts = jnp.sum(pcounts_ref[...], axis=0)        # [B, 1]
    mean = sums / jnp.maximum(counts, 1.0)            # exact divide
    u = u_ref[...].astype(jnp.float32)                # [B, Fu]

    def bn(h, g, b):
        mu = jnp.mean(h, axis=0, keepdims=True)
        var = jnp.mean((h - mu) ** 2, axis=0, keepdims=True)
        return (h - mu) * jax.lax.rsqrt(var + BN_EPS) * g + b

    def leaky(h):
        return jnp.where(h >= 0, h, slope * h)

    vec1 = vec1_ref[...]      # [2, d_in]  rows: g1, be1
    vec2 = vec2_ref[...]      # [7, go]    rows: bi1, g2, be2, bi2, g3, be3, bi3
    w1 = w1_ref[...]          # [d_in, go]

    # BN1 + Linear1 over concat([u, mean]) evaluated blockwise: BN is
    # per-feature and Linear is additive over feature blocks, so this is exact
    # and avoids an in-kernel lane concat.
    hu = bn(u, vec1[0:1, :n_u], vec1[1:2, :n_u])
    hx = bn(mean, vec1[0:1, n_u:], vec1[1:2, n_u:])
    h = (jnp.dot(hu, w1[:n_u, :], preferred_element_type=jnp.float32)
         + jnp.dot(hx, w1[n_u:, :], preferred_element_type=jnp.float32)
         + vec2[0:1, :])
    h = leaky(h)

    h = bn(h, vec2[1:2, :], vec2[2:3, :])
    h = jnp.dot(h, w23_ref[0], preferred_element_type=jnp.float32) + vec2[3:4, :]
    h = leaky(h)

    h = bn(h, vec2[4:5, :], vec2[5:6, :])
    out_ref[...] = (jnp.dot(h, w23_ref[1], preferred_element_type=jnp.float32)
                    + vec2[6:7, :])


def pack_params(params):
    """Pack parameters into a few arrays. Call ONCE, outside the per-call path."""
    return {
        "w1": params["w1"],                                           # [d_in, go]
        "w23": jnp.stack([params["w2"], params["w3"]], axis=0),       # [2, go, go]
        "vec1": jnp.concatenate([params["g1"], params["be1"]], axis=0),  # [2, d_in]
        "vec2": jnp.concatenate([params["bi1"], params["g2"], params["be2"],
                                 params["bi2"], params["g3"], params["be3"],
                                 params["bi3"]], axis=0),             # [7, go]
    }


def global_model_forward(x, batch, u, packed, leakiness, *,
                         tile_n=2048, n_split=2):
    """GlobalModel forward. tile_n must be a multiple of 128 (sweep 2048-8192)."""
    assert tile_n % 128 == 0, "tile_n must be a multiple of 128"
    n, n_x = x.shape
    b, n_u = u.shape
    go = packed["w1"].shape[1]

    n_tiles = max(1, -(-n // tile_n))
    n_split = max(1, min(n_split, n_tiles))
    tiles_per_split = -(-n_tiles // n_split)
    last_block = n_tiles - 1

    batch2d = batch.astype(jnp.int32).reshape(1, n)     # metadata-only reshape

    def node_block(s, t):
        # Clamp phantom tiles (grid padding of the parallel split) onto the last
        # real block; the in-kernel validity mask zeroes their contribution.
        return jnp.minimum(s * tiles_per_split + t, last_block)

    itemsize = jnp.dtype(x.dtype).itemsize
    cost = pl.CostEstimate(
        flops=2 * b * n_x * n_tiles * tile_n,
        transcendentals=0,
        bytes_accessed=n * n_x * itemsize + n * 4 + n_split * b * (n_x + 1) * 4)

    psums, pcounts = pl.pallas_call(
        functools.partial(_scatter_kernel, tile_n=tile_n, n_nodes=n,
                          tiles_per_split=tiles_per_split),
        out_shape=(jax.ShapeDtypeStruct((n_split, b, n_x), jnp.float32),
                   jax.ShapeDtypeStruct((n_split, b, 1), jnp.float32)),
        grid=(n_split, tiles_per_split),
        in_specs=[
            pl.BlockSpec((1, tile_n), lambda s, t: (0, node_block(s, t))),   # batch
            pl.BlockSpec((tile_n, n_x), lambda s, t: (node_block(s, t), 0)), # x
        ],
        out_specs=(
            pl.BlockSpec((None, b, n_x), lambda s, t: (s, 0, 0)),   # partial sums
            pl.BlockSpec((None, b, 1), lambda s, t: (s, 0, 0)),     # partial counts
        ),
        compiler_params=pltpu.CompilerParams(
            dimension_semantics=("parallel", "arbitrary"),  # split TCs x reduction
            vmem_limit_bytes=32 * 1024 * 1024),             # fits v5e/v6e/v7x
        cost_estimate=cost,
    )(batch2d, x)

    return pl.pallas_call(
        functools.partial(_mlp_kernel, slope=leakiness, n_x=n_x, n_u=n_u),
        out_shape=jax.ShapeDtypeStruct((b, go), jnp.float32),
    )(psums, pcounts, u.astype(jnp.float32), packed["w1"], packed["w23"],
      packed["vec1"], packed["vec2"])


def init_params(key, node_in, batch_size, global_out):
    d_in = node_in + batch_size
    ks = jax.random.split(key, 12)

    def lin(kw, kb, fan_in, fan_out):
        w = jax.random.normal(kw, (fan_in, fan_out), jnp.float32) / jnp.sqrt(fan_in)
        b = 0.1 * jax.random.normal(kb, (1, fan_out), jnp.float32)
        return w, b

    params = {}
    params["g1"] = 1.0 + 0.1 * jax.random.normal(ks[0], (1, d_in), jnp.float32)
    params["be1"] = 0.1 * jax.random.normal(ks[1], (1, d_in), jnp.float32)
    params["w1"], params["bi1"] = lin(ks[2], ks[3], d_in, global_out)
    params["g2"] = 1.0 + 0.1 * jax.random.normal(ks[4], (1, global_out), jnp.float32)
    params["be2"] = 0.1 * jax.random.normal(ks[5], (1, global_out), jnp.float32)
    params["w2"], params["bi2"] = lin(ks[6], ks[7], global_out, global_out)
    params["g3"] = 1.0 + 0.1 * jax.random.normal(ks[8], (1, global_out), jnp.float32)
    params["be3"] = 0.1 * jax.random.normal(ks[9], (1, global_out), jnp.float32)
    params["w3"], params["bi3"] = lin(ks[10], ks[11], global_out, global_out)
    return params


def reference_forward(x, batch, u, params, slope):
    # Pure-JAX reference mirroring the torch forward (scatter_mean + MLP).
    B, _ = u.shape
    Fx = x.shape[1]
    sums = jnp.zeros((B, Fx), jnp.float32).at[batch].add(x.astype(jnp.float32))
    counts = jnp.zeros((B,), jnp.float32).at[batch].add(1.0)
    mean = sums / jnp.maximum(counts, 1.0)[:, None]
    h = jnp.concatenate([u, mean], axis=1)

    def bn(h, g, b):
        mu = jnp.mean(h, axis=0, keepdims=True)
        var = jnp.mean((h - mu) ** 2, axis=0, keepdims=True)
        return (h - mu) * jax.lax.rsqrt(var + BN_EPS) * g + b

    def leaky(h):
        return jnp.where(h >= 0, h, slope * h)

    h = bn(h, params["g1"], params["be1"])
    h = h @ params["w1"] + params["bi1"]
    h = leaky(h)
    h = bn(h, params["g2"], params["be2"])
    h = h @ params["w2"] + params["bi2"]
    h = leaky(h)
    h = bn(h, params["g3"], params["be3"])
    return h @ params["w3"] + params["bi3"]


if __name__ == "__main__":
    node_in = 16      # F_x
    batch_size = 4    # B == F_u (module concatenates u with the scatter mean)
    global_out = 32
    leakiness = 0.1
    # N chosen so the default tile_n=2048 gives 3 real tiles (one ragged) plus
    # one phantom tile on the 2-way parallel split -> exercises all masking.
    N = 5000

    key = jax.random.PRNGKey(0)
    kx, ku, kb, kp = jax.random.split(key, 4)

    x = jax.random.normal(kx, (N, node_in), jnp.float32)
    u = jax.random.normal(ku, (batch_size, batch_size), jnp.float32)
    batch = jax.random.randint(kb, (N,), 0, batch_size, dtype=jnp.int32)
    params = init_params(kp, node_in, batch_size, global_out)
    packed = pack_params(params)   # packed once, outside the per-call path

    out = global_model_forward(x, batch, u, packed, leakiness)
    out = jax.block_until_ready(out)

    ref = reference_forward(x, batch, u, params, leakiness)
    assert out.shape == (batch_size, global_out)
    assert jnp.allclose(out, ref, rtol=1e-4, atol=1e-4), "mismatch vs reference"

    print("KERNEL_OK")
</pallas_src>

<mosaic_0001>
module attributes {stable_mosaic.version = 11 : i64} {
  func.func @_scatter_kernel(%arg0: i32, %arg1: i32, %arg2: memref<1x2048xi32, #tpu.memory_space<vmem>>, %arg3: memref<2048x16xf32, #tpu.memory_space<vmem>>, %arg4: memref<1x4x16xf32, #tpu.memory_space<vmem>>, %arg5: memref<1x4x1xf32, #tpu.memory_space<vmem>>) attributes {dimension_semantics = [#tpu.dimension_semantics<parallel>, #tpu.dimension_semantics<arbitrary>], iteration_bounds = array<i64: 2, 2>, scalar_prefetch = 0 : i64, scratch_operands = 0 : i64, tpu.core_type = #tpu.core_type<tc>, window_params = [{transform_indices = @transform_0, window_bounds = array<i64: 1, 2048>}, {transform_indices = @transform_1, window_bounds = array<i64: 2048, 16>}, {transform_indices = @transform_2, window_bounds = array<i64: 1, 4, 16>}, {transform_indices = @transform_3, window_bounds = array<i64: 1, 4, 1>}]} {
    %c0_i32 = arith.constant 0 : i32
    %0 = arith.cmpi eq, %arg1, %c0_i32 : i32
    %1 = arith.extui %0 : i1 to i32
    %c0_i32_0 = arith.constant 0 : i32
    %2 = arith.cmpi ne, %1, %c0_i32_0 : i32
    scf.if %2 {
      %cst_19 = arith.constant 0.000000e+00 : f32
      %46 = vector.broadcast %cst_19 : f32 to vector<4x16xf32>
      %c0_20 = arith.constant 0 : index
      %c0_21 = arith.constant 0 : index
      %c0_22 = arith.constant 0 : index
      %47 = vector.load %arg4[%c0_20, %c0_21, %c0_22] : memref<1x4x16xf32, #tpu.memory_space<vmem>>, vector<1x4x16xf32>
      %48 = vector.shape_cast %47 : vector<1x4x16xf32> to vector<4x16xf32>
      %49 = vector.shape_cast %46 : vector<4x16xf32> to vector<1x4x16xf32>
      tpu.vector_store %arg4[%c0_20, %c0_21, %c0_22], %49 {strides = array<i32>} : memref<1x4x16xf32, #tpu.memory_space<vmem>>, vector<1x4x16xf32>,
      %cst_23 = arith.constant 0.000000e+00 : f32
      %50 = vector.broadcast %cst_23 : f32 to vector<4x1xf32>
      %c0_24 = arith.constant 0 : index
      %c0_25 = arith.constant 0 : index
      %c0_26 = arith.constant 0 : index
      %51 = vector.load %arg5[%c0_24, %c0_25, %c0_26] : memref<1x4x1xf32, #tpu.memory_space<vmem>>, vector<1x4x1xf32>
      %52 = vector.shape_cast %51 : vector<1x4x1xf32> to vector<4x1xf32>
      %53 = vector.shape_cast %50 : vector<4x1xf32> to vector<1x4x1xf32>
      tpu.vector_store %arg5[%c0_24, %c0_25, %c0_26], %53 {strides = array<i32>} : memref<1x4x1xf32, #tpu.memory_space<vmem>>, vector<1x4x1xf32>,
    } else {
    }
    %c2_i32 = arith.constant 2 : i32
    %3 = arith.muli %arg0, %c2_i32 : i32
    %4 = arith.addi %3, %arg1 : i32
    %c2048_i32 = arith.constant 2048 : i32
    %5 = arith.muli %4, %c2048_i32 : i32
    %c0 = arith.constant 0 : index
    %c0_1 = arith.constant 0 : index
    %6 = vector.load %arg2[%c0, %c0_1] : memref<1x2048xi32, #tpu.memory_space<vmem>>, vector<1x2048xi32>
    %7 = tpu.iota {dimensions = array<i32: 1>} : vector<1x2048xi32>
    %8 = vector.broadcast %5 : i32 to vector<1x2048xi32>
    %9 = arith.addi %8, %7 : vector<1x2048xi32>
    %c5000_i32 = arith.constant 5000 : i32
    %10 = vector.broadcast %c5000_i32 : i32 to vector<1x2048xi32>
    %11 = arith.cmpi slt, %9, %10 : vector<1x2048xi32>
    %12 = tpu.iota {dimensions = array<i32: 0>} : vector<4x2048xi32>
    %13 = vector.broadcast %6 : vector<1x2048xi32> to vector<4x2048xi32>
    %14 = arith.cmpi eq, %12, %13 : vector<4x2048xi32>
    %15 = vector.broadcast %11 : vector<1x2048xi1> to vector<4x2048xi1>
    %16 = arith.andi %14, %15 : vector<4x2048xi1>
    %c0_2 = arith.constant 0 : index
    %c0_3 = arith.constant 0 : index
    %c0_4 = arith.constant 0 : index
    %17 = vector.load %arg5[%c0_2, %c0_3, %c0_4] : memref<1x4x1xf32, #tpu.memory_space<vmem>>, vector<1x4x1xf32>
    %18 = vector.shape_cast %17 : vector<1x4x1xf32> to vector<4x1xf32>
    %19 = arith.extui %16 : vector<4x2048xi1> to vector<4x2048xi32>
    %20 = arith.sitofp %19 : vector<4x2048xi32> to vector<4x2048xf32>
    %cst = arith.constant dense<0.000000e+00> : vector<4xf32>
    %21 = vector.multi_reduction <add>, %20, %cst [1] : vector<4x2048xf32> to vector<4xf32>
    %22 = vector.shape_cast %21 : vector<4xf32> to vector<4x1xf32>
    %23 = arith.addf %18, %22 : vector<4x1xf32>
    %c0_5 = arith.constant 0 : index
    %c0_6 = arith.constant 0 : index
    %c0_7 = arith.constant 0 : index
    %24 = vector.load %arg5[%c0_5, %c0_6, %c0_7] : memref<1x4x1xf32, #tpu.memory_space<vmem>>, vector<1x4x1xf32>
    %25 = vector.shape_cast %24 : vector<1x4x1xf32> to vector<4x1xf32>
    %26 = vector.shape_cast %23 : vector<4x1xf32> to vector<1x4x1xf32>
    tpu.vector_store %arg5[%c0_5, %c0_6, %c0_7], %26 {strides = array<i32>} : memref<1x4x1xf32, #tpu.memory_space<vmem>>, vector<1x4x1xf32>,
    %c0_8 = arith.constant 0 : index
    %c0_9 = arith.constant 0 : index
    %27 = vector.load %arg3[%c0_8, %c0_9] : memref<2048x16xf32, #tpu.memory_space<vmem>>, vector<2048x16xf32>
    %28 = tpu.iota {dimensions = array<i32: 0>} : vector<2048x1xi32>
    %29 = vector.broadcast %5 : i32 to vector<2048x1xi32>
    %30 = arith.addi %29, %28 : vector<2048x1xi32>
    %c5000_i32_10 = arith.constant 5000 : i32
    %31 = vector.broadcast %c5000_i32_10 : i32 to vector<2048x1xi32>
    %32 = arith.cmpi slt, %30, %31 : vector<2048x1xi32>
    %cst_11 = arith.constant 0.000000e+00 : f32
    %33 = vector.broadcast %cst_11 : f32 to vector<2048x16xf32>
    %34 = vector.shape_cast %32 : vector<2048x1xi1> to vector<2048x1xi1>
    %35 = vector.broadcast %34 : vector<2048x1xi1> to vector<2048x16xi1>
    %36 = arith.select %35, %27, %33 : vector<2048x16xi1>, vector<2048x16xf32>
    %37 = arith.extui %16 : vector<4x2048xi1> to vector<4x2048xi32>
    %38 = arith.sitofp %37 : vector<4x2048xi32> to vector<4x2048xf32>
    %c0_12 = arith.constant 0 : index
    %c0_13 = arith.constant 0 : index
    %c0_14 = arith.constant 0 : index
    %39 = vector.load %arg4[%c0_12, %c0_13, %c0_14] : memref<1x4x16xf32, #tpu.memory_space<vmem>>, vector<1x4x16xf32>
    %40 = vector.shape_cast %39 : vector<1x4x16xf32> to vector<4x16xf32>
    %cst_15 = arith.constant dense<0.000000e+00> : vector<4x16xf32>
    %41 = tpu.matmul %38, %36, %cst_15 {dimension_numbers = #tpu.dot_dimension_numbers<[1], [0], [0], [1], [0, 0, 1, 1], [], []>} : vector<4x2048xf32>, vector<2048x16xf32>, vector<4x16xf32> -> vector<4x16xf32>
    %42 = arith.addf %40, %41 : vector<4x16xf32>
    %c0_16 = arith.constant 0 : index
    %c0_17 = arith.constant 0 : index
    %c0_18 = arith.constant 0 : index
    %43 = vector.load %arg4[%c0_16, %c0_17, %c0_18] : memref<1x4x16xf32, #tpu.memory_space<vmem>>, vector<1x4x16xf32>
    %44 = vector.shape_cast %43 : vector<1x4x16xf32> to vector<4x16xf32>
    %45 = vector.shape_cast %42 : vector<4x16xf32> to vector<1x4x16xf32>
    tpu.vector_store %arg4[%c0_16, %c0_17, %c0_18], %45 {strides = array<i32>} : memref<1x4x16xf32, #tpu.memory_space<vmem>>, vector<1x4x16xf32>,
    return
  }
  func.func @transform_0(%arg0: i32, %arg1: i32) -> (i32, i32) {
    %c2_i32 = arith.constant 2 : i32
    %0 = arith.muli %arg0, %c2_i32 : i32
    %1 = arith.addi %0, %arg1 : i32
    %c2_i32_0 = arith.constant 2 : i32
    %2 = arith.minsi %1, %c2_i32_0 : i32
    %c0_i32 = arith.constant 0 : i32
    %c0_i32_1 = arith.constant 0 : i32
    return %c0_i32, %2 : i32, i32
  }
  func.func @transform_1(%arg0: i32, %arg1: i32) -> (i32, i32) {
    %c2_i32 = arith.constant 2 : i32
    %0 = arith.muli %arg0, %c2_i32 : i32
    %1 = arith.addi %0, %arg1 : i32
    %c2_i32_0 = arith.constant 2 : i32
    %2 = arith.minsi %1, %c2_i32_0 : i32
    %c0_i32 = arith.constant 0 : i32
    %c0_i32_1 = arith.constant 0 : i32
    return %2, %c0_i32 : i32, i32
  }
  func.func @transform_2(%arg0: i32, %arg1: i32) -> (i32, i32, i32) {
    %c0_i32 = arith.constant 0 : i32
    %c0_i32_0 = arith.constant 0 : i32
    %c0_i32_1 = arith.constant 0 : i32
    return %arg0, %c0_i32, %c0_i32_0 : i32, i32, i32
  }
  func.func @transform_3(%arg0: i32, %arg1: i32) -> (i32, i32, i32) {
    %c0_i32 = arith.constant 0 : i32
    %c0_i32_0 = arith.constant 0 : i32
    %c0_i32_1 = arith.constant 0 : i32
    return %arg0, %c0_i32, %c0_i32_0 : i32, i32, i32
  }
}

</mosaic_0001>

<llo_original>
// kernel: tpu_custom_call.1
$region0: #{tpu_custom_call.1}
  #allocation0 [shape = 'u32[]', space=smem, size = 0x4, offset = 0x4, fixed_abs, tag = 'smem constant byte address 0x4 - core index']
  #allocation1 [shape = 'u32[72,128]{1,0:T(1,128)}', space=vmem, size = 0x9000, scoped, tag = 'internal scratch']
  %s0 = inlined_call_operand.vmem [shape: s32[1,5000], index: 0, kind: input, shape index: {}]
  %s1 = inlined_call_operand.vmem [shape: f32[5000,16], index: 1, kind: input, shape index: {}]
  %s2 = inlined_call_operand.hbm [shape: f32[2,4,16], index: 2, kind: output, shape index: {0}]
  %s3 = inlined_call_operand.vmem [shape: f32[2,4,1], index: 3, kind: output, shape index: {1}]
  %4 = xla_tuple %s2, %s3
  %s5 = sld [smem:[#allocation0]]
  $region53: #{tpu_custom_call.1} parent=0
    _
  %s7 = ssub.s32 1, %s5
  %s8 = scalar_select 0, %s7, %s5
  $region1: #{tpu_custom_call.1} parent=0
    #allocation2 [shape = 'u8[4096]{0}', space=vmem, size = 0x1000, scoped, tag = 'output window, operand 0']
    #allocation3 [shape = 's32[2]{0}', space=sflag, size = 0x8, scoped, tag = 'scoped memory for tpu_custom_call.1']
    %9 = vsyncpa [#allocation3], 0
    %s10 = scalar_lea.sflag [#allocation3], 1
    %11 = vsyncpa %s10, 0
    loop: start=0, step=1, limit=6
    $region2: #{tpu_custom_call.1} parent=1 // loop_pre_header
      _
    $region3: #{tpu_custom_call.1} parent=1 // loop_header
      %s13 = sphi 0, %s17
      %p14 = scmp.ge.s32.totalorder %s13, 6
      %s20 = sphi 0, %s32
      %s21 = sphi 0, %s28
      %s22 = sphi 0, %s20
      %s23 = sphi 0, %s21
      %s24 = sphi 0, %s22
      %s25 = sphi 0, %s23
      %s43 = sphi 0, %s45
      %s46 = sphi 0, %s43
      %s47 = sphi 0, %s46
      %s63 = sphi 0, %s47
      %s77 = sphi 0, %s79
      %s80 = sphi 0, %s77
      %s81 = sphi 0, %s80
      %s97 = sphi 0, %s81
      %s103 = sphi 0, %s105
      %s106 = sphi 0, %s103
      %s107 = sphi 0, %s106
      %s123 = sphi 0, %s107
      %s129 = sphi 0, %s131
      %s132 = sphi 0, %s129
      %s133 = sphi 0, %s132
      %s149 = sphi 0, %s133
    $region4: #{tpu_custom_call.1} parent=1 // loop_header_branch
      %16 = sbr.rel (%p14) target = $region8
    $region5: #{tpu_custom_call.1} parent=1 // loop_body
      %s18 = ssub.s32 %s13, 1
      %s19 = ssub.s32 %s13, 2
      %s26 = sadd.s32 1, %s21
      %p27 = scmp.ge.s32.totalorder %s26, 2
      %s28 = scalar_select %p27, 0, %s26
      %s29 = sadd.s32 1, %s20
      %s30 = scalar_select %p27, %s29, %s20
      %p31 = scmp.ge.s32.totalorder %s30, 2
      %s32 = scalar_select %p31, 0, %s30
      %s33 = smul.u32 %s20, 2
      %s34 = sadd.s32 %s33, %s21
      %p35 = scmp.lt.s32.totalorder %s34, 2
      %s36 = scalar_select %p35, %s34, 2
      %s37 = smul.u32 %s32, 2
      %s38 = sadd.s32 %s37, %s28
      %p39 = scmp.lt.s32.totalorder %s38, 2
      %s40 = scalar_select %p39, %s38, 2
      %s41 = ssub.s32 %s36, %s40
      %p42 = scmp.eq.s32.totalorder %s41, 0
      %s44 = sadd.s32 %s43, 1
      %s45 = scalar_select %p42, %s43, %s44
      %p48 = pneg %p42
      %p49 = scmp.eq.s32.totalorder %s13, 3
      %p50 = por %p48, %p49
      %p51 = scmp.ne.s32.totalorder %s43, %s46
      %p52 = scmp.eq.s32.totalorder %s13, 0
      %p53 = por %p51, %p52
      %p54 = scmp.ne.s32.totalorder %s43, %s46
      %p55 = scmp.eq.s32.totalorder %s18, 3
      %p56 = por %p54, %p55
      %p57 = scmp.ne.s32.totalorder %s46, %s47
      %p58 = scmp.eq.s32.totalorder %s18, 0
      %p59 = por %p57, %p58
      %p60 = scmp.ne.s32.totalorder %s46, %s47
      %p61 = scmp.eq.s32.totalorder %s19, 3
      %p62 = por %p60, %p61
      %p64 = scmp.ne.s32.totalorder %s47, %s63
      %p65 = scmp.eq.s32.totalorder %s19, 0
      %p66 = por %p64, %p65
      %s67 = smul.u32 %s20, 2
      %s68 = sadd.s32 %s67, %s21
      %p69 = scmp.lt.s32.totalorder %s68, 2
      %s70 = scalar_select %p69, %s68, 2
      %s71 = smul.u32 %s32, 2
      %s72 = sadd.s32 %s71, %s28
      %p73 = scmp.lt.s32.totalorder %s72, 2
      %s74 = scalar_select %p73, %s72, 2
      %s75 = ssub.s32 %s70, %s74
      %p76 = scmp.eq.s32.totalorder %s75, 0
      %s78 = sadd.s32 %s77, 1
      %s79 = scalar_select %p76, %s77, %s78
      %p82 = pneg %p76
      %p83 = scmp.eq.s32.totalorder %s13, 3
      %p84 = por %p82, %p83
      %p85 = scmp.ne.s32.totalorder %s77, %s80
      %p86 = scmp.eq.s32.totalorder %s13, 0
      %p87 = por %p85, %p86
      %p88 = scmp.ne.s32.totalorder %s77, %s80
      %p89 = scmp.eq.s32.totalorder %s18, 3
      %p90 = por %p88, %p89
      %p91 = scmp.ne.s32.totalorder %s80, %s81
      %p92 = scmp.eq.s32.totalorder %s18, 0
      %p93 = por %p91, %p92
      %p94 = scmp.ne.s32.totalorder %s80, %s81
      %p95 = scmp.eq.s32.totalorder %s19, 3
      %p96 = por %p94, %p95
      %p98 = scmp.ne.s32.totalorder %s81, %s97
      %p99 = scmp.eq.s32.totalorder %s19, 0
      %p100 = por %p98, %p99
      %s101 = ssub.s32 %s20, %s32
      %p102 = scmp.eq.s32.totalorder %s101, 0
      %s104 = sadd.s32 %s103, 1
      %s105 = scalar_select %p102, %s103, %s104
      %p108 = pneg %p102
      %p109 = scmp.eq.s32.totalorder %s13, 3
      %p110 = por %p108, %p109
      %p111 = scmp.ne.s32.totalorder %s103, %s106
      %p112 = scmp.eq.s32.totalorder %s13, 0
      %p113 = por %p111, %p112
      %p114 = scmp.ne.s32.totalorder %s103, %s106
      %p115 = scmp.eq.s32.totalorder %s18, 3
      %p116 = por %p114, %p115
      %p117 = scmp.ne.s32.totalorder %s106, %s107
      %p118 = scmp.eq.s32.totalorder %s18, 0
      %p119 = por %p117, %p118
      %p120 = scmp.ne.s32.totalorder %s106, %s107
      %p121 = scmp.eq.s32.totalorder %s19, 3
      %p122 = por %p120, %p121
      %p124 = scmp.ne.s32.totalorder %s107, %s123
      %p125 = scmp.eq.s32.totalorder %s19, 0
      %p126 = por %p124, %p125
      %s127 = ssub.s32 %s20, %s32
      %p128 = scmp.eq.s32.totalorder %s127, 0
      %s130 = sadd.s32 %s129, 1
      %s131 = scalar_select %p128, %s129, %s130
      %p134 = pneg %p128
      %p135 = scmp.eq.s32.totalorder %s13, 3
      %p136 = por %p134, %p135
      %p137 = scmp.ne.s32.totalorder %s129, %s132
      %p138 = scmp.eq.s32.totalorder %s13, 0
      %p139 = por %p137, %p138
      %p140 = scmp.ne.s32.totalorder %s129, %s132
      %p141 = scmp.eq.s32.totalorder %s18, 3
      %p142 = por %p140, %p141
      %p143 = scmp.ne.s32.totalorder %s132, %s133
      %p144 = scmp.eq.s32.totalorder %s18, 0
      %p145 = por %p143, %p144
      %p146 = scmp.ne.s32.totalorder %s132, %s133
      %p147 = scmp.eq.s32.totalorder %s19, 3
      %p148 = por %p146, %p147
      %p150 = scmp.ne.s32.totalorder %s133, %s149
      %p151 = scmp.eq.s32.totalorder %s19, 0
      %p152 = por %p150, %p151
      %p153 = scmp.le.s32.totalorder 1, %s13
      %p154 = scmp.lt.s32.totalorder %s13, 5
      %p155 = pnand %p153, %p154
      %p156 = pneg %p155
      // Predicated region
      $region9: #{tpu_custom_call.1} parent=5 // pred_check
        _
      $region10: #{tpu_custom_call.1} parent=5 // pred_check_branch
        %158 = sbr.rel (%p155) target = $region12
      $region11: #{tpu_custom_call.1} parent=5 // pred_region
        %s159 = ssub.s32 %s13, 1
      $region12: #{tpu_custom_call.1} parent=5 // pred_fallthru
        _
      %p160 = scmp.lt.s32.totalorder %s13, 4
      // Predicated region
      $region13: #{tpu_custom_call.1} parent=5 // pred_check
        %p161 = pneg %p160
      $region14: #{tpu_custom_call.1} parent=5 // pred_check_branch
        %163 = sbr.rel (%p161) target = $region16
      $region15: #{tpu_custom_call.1} parent=5 // pred_region
        // Predicated region
        $region17: #{tpu_custom_call.1} parent=15 // pred_check
          %p164 = pneg %p53
        $region18: #{tpu_custom_call.1} parent=15 // pred_check_branch
          %166 = sbr.rel (%p164) target = $region20
        $region19: #{tpu_custom_call.1} parent=15 // pred_region
          %s167 = smul.u32 %s20, 2
          %s168 = sadd.s32 %s167, %s21
          %p169 = scmp.lt.s32.totalorder %s168, 2
          %s170 = scalar_select %p169, %s168, 2
          %s171 = smul.u32 16, %s170
          %s172 = ssub.s32 40, %s171
          %p173 = scmp.lt.s32.totalorder %s172, 16
          %s174 = scalar_select %p173, %s172, 16
          %p175 = scmp.lt.s32.totalorder %s171, 39
          %s176 = scalar_select %p175, %s171, 39
          %s177 = scalar_lea.vmem %s0, %s176
          %s178 = smul.u32 %s20, 2
          %s179 = sadd.s32 %s178, %s21
          %p180 = scmp.lt.s32.totalorder %s179, 2
          %s181 = scalar_select %p180, %s179, 2
          %s182 = smul.u32 16, %s181
          %s183 = ssub.s32 40, %s182
          %p184 = scmp.lt.s32.totalorder %s183, 16
          %s185 = scalar_select %p184, %s183, 16
        $region20: #{tpu_custom_call.1} parent=15 // pred_fallthru
          _
        // Predicated region
        $region21: #{tpu_custom_call.1} parent=15 // pred_check
          %p186 = pneg %p87
        $region22: #{tpu_custom_call.1} parent=15 // pred_check_branch
          %188 = sbr.rel (%p186) target = $region24
        $region23: #{tpu_custom_call.1} parent=15 // pred_region
          %s189 = smul.u32 %s20, 2
          %s190 = sadd.s32 %s189, %s21
          %p191 = scmp.lt.s32.totalorder %s190, 2
          %s192 = scalar_select %p191, %s190, 2
          %s193 = smul.u32 256, %s192
          %s194 = ssub.s32 625, %s193
          %p195 = scmp.lt.s32.totalorder %s194, 256
          %s196 = scalar_select %p195, %s194, 256
          %s197 = smul.u32 8, %s196
          %p198 = scmp.lt.s32.totalorder %s193, 624
          %s199 = scalar_select %p198, %s193, 624
          %s200 = smul.addr %s199, 8
          %s201 = scalar_lea.vmem %s1, %s200
          %s202 = smul.u32 %s20, 2
          %s203 = sadd.s32 %s202, %s21
          %p204 = scmp.lt.s32.totalorder %s203, 2
          %s205 = scalar_select %p204, %s203, 2
          %s206 = smul.u32 256, %s205
          %s207 = ssub.s32 625, %s206
          %p208 = scmp.lt.s32.totalorder %s207, 256
          %s209 = scalar_select %p208, %s207, 256
          %s210 = smul.u32 8, %s209
        $region24: #{tpu_custom_call.1} parent=15 // pred_fallthru
          _
      $region16: #{tpu_custom_call.1} parent=5 // pred_fallthru
        _
      %p211 = scmp.le.s32.totalorder 1, %s13
      %p212 = scmp.lt.s32.totalorder %s13, 5
      %p213 = pnand %p211, %p212
      %p214 = pneg %p213
      // Predicated region
      $region25: #{tpu_custom_call.1} parent=5 // pred_check
        _
      $region26: #{tpu_custom_call.1} parent=5 // pred_check_branch
        %216 = sbr.rel (%p213) target = $region28
      $region27: #{tpu_custom_call.1} parent=5 // pred_region
        %s217 = ssub.s32 %s13, 1
        %s218 = smul.u32 %s22, 2
        %s219 = sadd.s32 %s218, %s23
        %p220 = scmp.lt.s32.totalorder %s219, 2
        %s221 = scalar_select %p220, %s219, 2
        %s222 = smul.u32 16, %s221
        %s223 = ssub.s32 40, %s222
        %p224 = scmp.lt.s32.totalorder %s223, 16
        %s225 = scalar_select %p224, %s223, 16
        %p226 = scmp.lt.s32.totalorder %s222, 39
        %s227 = scalar_select %p226, %s222, 39
        %s228 = scalar_lea.vmem %s0, %s227
        %p229 = pneg %p59
        %p230 = pneg %p56
        %s231 = smul.u32 %s22, 2
        %s232 = sadd.s32 %s231, %s23
        %p233 = scmp.lt.s32.totalorder %s232, 2
        %s234 = scalar_select %p233, %s232, 2
        %s235 = smul.u32 256, %s234
        %s236 = ssub.s32 625, %s235
        %p237 = scmp.lt.s32.totalorder %s236, 256
        %s238 = scalar_select %p237, %s236, 256
        %s239 = smul.u32 8, %s238
        %p240 = scmp.lt.s32.totalorder %s235, 624
        %s241 = scalar_select %p240, %s235, 624
        %s242 = smul.addr %s241, 8
        %s243 = scalar_lea.vmem %s1, %s242
        %p244 = pneg %p93
        %p245 = pneg %p90
        %p246 = pneg %p119
        %p247 = pneg %p116
        %s248 = sand.u32 %s106, 1
        %s249 = scalar_lea.sflag [#allocation3], %s248
        %s250 = sand.u32 %s106, 1
        %s251 = smul.addr %s250, 4
        %s252 = scalar_lea.vmem [#allocation2], %s251
        %p253 = pneg %p145
        %p254 = pneg %p142
        %p255 = scmp.lt.s32.totalorder %s22, 1
        %s256 = scalar_select %p255, %s22, 1
        %s257 = smul.addr %s256, 4
        %s258 = scalar_lea.vmem %s3, %s257
        %s259 = smul.u32 %s22, 2
        %s260 = sadd.s32 %s259, %s23
        %p261 = scmp.lt.s32.totalorder %s260, 2
        %s262 = scalar_select %p261, %s260, 2
        %s263 = smul.u32 16, %s262
        %s264 = ssub.s32 40, %s263
        %p265 = scmp.lt.s32.totalorder %s264, 16
        %s266 = scalar_select %p265, %s264, 16
        %p267 = scmp.lt.s32.totalorder %s263, 39
        %s268 = scalar_select %p267, %s263, 39
        %s269 = scalar_lea.vmem %s0, %s268
        %s270 = smul.u32 %s22, 2
        %s271 = sadd.s32 %s270, %s23
        %p272 = scmp.lt.s32.totalorder %s271, 2
        %s273 = scalar_select %p272, %s271, 2
        %s274 = smul.u32 16, %s273
        %s275 = ssub.s32 40, %s274
        %p276 = scmp.lt.s32.totalorder %s275, 16
        %s277 = scalar_select %p276, %s275, 16
        %s278 = smul.u32 %s22, 2
        %s279 = sadd.s32 %s278, %s23
        %p280 = scmp.lt.s32.totalorder %s279, 2
        %s281 = scalar_select %p280, %s279, 2
        %s282 = smul.u32 256, %s281
        %s283 = ssub.s32 625, %s282
        %p284 = scmp.lt.s32.totalorder %s283, 256
        %s285 = scalar_select %p284, %s283, 256
        %s286 = smul.u32 8, %s285
        %p287 = scmp.lt.s32.totalorder %s282, 624
        %s288 = scalar_select %p287, %s282, 624
        %s289 = smul.addr %s288, 8
        %s290 = scalar_lea.vmem %s1, %s289
        %s291 = smul.u32 %s22, 2
        %s292 = sadd.s32 %s291, %s23
        %p293 = scmp.lt.s32.totalorder %s292, 2
        %s294 = scalar_select %p293, %s292, 2
        %s295 = smul.u32 256, %s294
        %s296 = ssub.s32 625, %s295
        %p297 = scmp.lt.s32.totalorder %s296, 256
        %s298 = scalar_select %p297, %s296, 256
        %s299 = smul.u32 8, %s298
        %p300 = scmp.lt.s32.totalorder %s22, 1
        %s301 = scalar_select %p300, %s22, 1
        %s302 = smul.addr %s301, 4
        %s303 = scalar_lea.vmem %s3, %s302
        %p304 = scmp.eq.s32.totalorder %s23, 0
        // Predicated region
        $region29: #{tpu_custom_call.1} parent=27 // pred_check
          %p305 = pneg %p304
        $region30: #{tpu_custom_call.1} parent=27 // pred_check_branch
          %307 = sbr.rel (%p305) target = $region32
        $region31: #{tpu_custom_call.1} parent=27 // pred_region
          %vm308 = vcmask 125952
          %309 = vst.msk [vmem:[%s252] sm:$0xf] %vm308, 0.0
          %vm310 = vcmask 3072
          %311 = vst.msk [vmem:[%s303] sm:$0xf] %vm310, 0.0
        $region32: #{tpu_custom_call.1} parent=27 // pred_fallthru
          _
        %s312 = smul.u32 %s22, 2
        %s313 = sadd.s32 %s312, %s23
        %s314 = smul.u32 %s313, 2048
        %v315 = vld [vmem:[%s269] sm:$0xff]
        %v316 = vld [vmem:[%s269 + $0x8] sm:$0xff]
        %v317 = vlaneseq
        %v318 = vand.u32 %v317, 127
        %v319 = vadd.s32 %v318, 128
        %v320 = vadd.s32 %v318, 256
        %v321 = vadd.s32 %v318, 384
        %v322 = vadd.s32 %v318, 512
        %v323 = vadd.s32 %v318, 640
        %v324 = vadd.s32 %v318, 768
        %v325 = vadd.s32 %v318, 896
        %v326 = vadd.s32 %v318, 1024
        %v327 = vadd.s32 %v318, 1152
        %v328 = vadd.s32 %v318, 1280
        %v329 = vadd.s32 %v318, 1408
        %v330 = vadd.s32 %v318, 1536
        %v331 = vadd.s32 %v318, 1664
        %v332 = vadd.s32 %v318, 1792
        %v333 = vadd.s32 %v318, 1920
        %v334 = vstv %s314
        %v335 = vadd.s32 %v334, %v318
        %v336 = vadd.s32 %v334, %v319
        %v337 = vadd.s32 %v334, %v320
        %v338 = vadd.s32 %v334, %v321
        %v339 = vadd.s32 %v334, %v322
        %v340 = vadd.s32 %v334, %v323
        %v341 = vadd.s32 %v334, %v324
        %v342 = vadd.s32 %v334, %v325
        %v343 = vadd.s32 %v334, %v326
        %v344 = vadd.s32 %v334, %v327
        %v345 = vadd.s32 %v334, %v328
        %v346 = vadd.s32 %v334, %v329
        %v347 = vadd.s32 %v334, %v330
        %v348 = vadd.s32 %v334, %v331
        %v349 = vadd.s32 %v334, %v332
        %v350 = vadd.s32 %v334, %v333
        %vm351 = vcmp.lt.s32.totalorder %v335, 5000
        %vm352 = vcmp.lt.s32.totalorder %v336, 5000
        %vm353 = vcmp.lt.s32.totalorder %v337, 5000
        %vm354 = vcmp.lt.s32.totalorder %v338, 5000
        %vm355 = vcmp.lt.s32.totalorder %v339, 5000
        %vm356 = vcmp.lt.s32.totalorder %v340, 5000
        %vm357 = vcmp.lt.s32.totalorder %v341, 5000
        %vm358 = vcmp.lt.s32.totalorder %v342, 5000
        %vm359 = vcmp.lt.s32.totalorder %v343, 5000
        %vm360 = vcmp.lt.s32.totalorder %v344, 5000
        %vm361 = vcmp.lt.s32.totalorder %v345, 5000
        %vm362 = vcmp.lt.s32.totalorder %v346, 5000
        %vm363 = vcmp.lt.s32.totalorder %v347, 5000
        %vm364 = vcmp.lt.s32.totalorder %v348, 5000
        %vm365 = vcmp.lt.s32.totalorder %v349, 5000
        %vm366 = vcmp.lt.s32.totalorder %v350, 5000
        %v367 = vlaneseq
        %v368 = vshrl.u32 %v367, 7
        %v369 = vperm.slane %v315, 0
        %v370 = vperm.slane %v315, 1
        %v371 = vperm.slane %v315, 2
        %v372 = vperm.slane %v315, 3
        %v373 = vperm.slane %v315, 4
        %v374 = vperm.slane %v315, 5
        %v375 = vperm.slane %v315, 6
        %v376 = vperm.slane %v315, 7
        %v377 = vperm.slane %v316, 0
        %v378 = vperm.slane %v316, 1
        %v379 = vperm.slane %v316, 2
        %v380 = vperm.slane %v316, 3
        %v381 = vperm.slane %v316, 4
        %v382 = vperm.slane %v316, 5
        %v383 = vperm.slane %v316, 6
        %v384 = vperm.slane %v316, 7
        %vm385 = vcmp.eq.s32.totalorder %v368, %v369
        %vm386 = vcmp.eq.s32.totalorder %v368, %v370
        %vm387 = vcmp.eq.s32.totalorder %v368, %v371
        %vm388 = vcmp.eq.s32.totalorder %v368, %v372
        %vm389 = vcmp.eq.s32.totalorder %v368, %v373
        %vm390 = vcmp.eq.s32.totalorder %v368, %v374
        %vm391 = vcmp.eq.s32.totalorder %v368, %v375
        %vm392 = vcmp.eq.s32.totalorder %v368, %v376
        %vm393 = vcmp.eq.s32.totalorder %v368, %v377
        %vm394 = vcmp.eq.s32.totalorder %v368, %v378
        %vm395 = vcmp.eq.s32.totalorder %v368, %v379
        %vm396 = vcmp.eq.s32.totalorder %v368, %v380
        %vm397 = vcmp.eq.s32.totalorder %v368, %v381
        %vm398 = vcmp.eq.s32.totalorder %v368, %v382
        %vm399 = vcmp.eq.s32.totalorder %v368, %v383
        %vm400 = vcmp.eq.s32.totalorder %v368, %v384
        %v401 = vsel %vm351, 1, 0
        %v402 = vsel %vm352, 1, 0
        %v403 = vsel %vm353, 1, 0
        %v404 = vsel %vm354, 1, 0
        %v405 = vsel %vm355, 1, 0
        %v406 = vsel %vm356, 1, 0
        %v407 = vsel %vm357, 1, 0
        %v408 = vsel %vm358, 1, 0
        %v409 = vsel %vm359, 1, 0
        %v410 = vsel %vm360, 1, 0
        %v411 = vsel %vm361, 1, 0
        %v412 = vsel %vm362, 1, 0
        %v413 = vsel %vm363, 1, 0
        %v414 = vsel %vm364, 1, 0
        %v415 = vsel %vm365, 1, 0
        %v416 = vsel %vm366, 1, 0
        %vm417 = vcmp.eq.s32.totalorder %v401, 1
        %vm418 = vcmp.eq.s32.totalorder %v402, 1
        %vm419 = vcmp.eq.s32.totalorder %v403, 1
        %vm420 = vcmp.eq.s32.totalorder %v404, 1
        %vm421 = vcmp.eq.s32.totalorder %v405, 1
        %vm422 = vcmp.eq.s32.totalorder %v406, 1
        %vm423 = vcmp.eq.s32.totalorder %v407, 1
        %vm424 = vcmp.eq.s32.totalorder %v408, 1
        %vm425 = vcmp.eq.s32.totalorder %v409, 1
        %vm426 = vcmp.eq.s32.totalorder %v410, 1
        %vm427 = vcmp.eq.s32.totalorder %v411, 1
        %vm428 = vcmp.eq.s32.totalorder %v412, 1
        %vm429 = vcmp.eq.s32.totalorder %v413, 1
        %vm430 = vcmp.eq.s32.totalorder %v414, 1
        %vm431 = vcmp.eq.s32.totalorder %v415, 1
        %vm432 = vcmp.eq.s32.totalorder %v416, 1
        %vm433 = vmand %vm385, %vm417
        %vm434 = vmand %vm386, %vm418
        %vm435 = vmand %vm387, %vm419
        %vm436 = vmand %vm388, %vm420
        %vm437 = vmand %vm389, %vm421
        %vm438 = vmand %vm390, %vm422
        %vm439 = vmand %vm391, %vm423
        %vm440 = vmand %vm392, %vm424
        %vm441 = vmand %vm393, %vm425
        %vm442 = vmand %vm394, %vm426
        %vm443 = vmand %vm395, %vm427
        %vm444 = vmand %vm396, %vm428
        %vm445 = vmand %vm397, %vm429
        %vm446 = vmand %vm398, %vm430
        %vm447 = vmand %vm399, %vm431
        %vm448 = vmand %vm400, %vm432
        %v449 = vld [vmem:[%s303] sm:$0xf]
        %v450 = vsel %vm433, 1, 0
        %v451 = vsel %vm434, 1, 0
        %v452 = vsel %vm435, 1, 0
        %v453 = vsel %vm436, 1, 0
        %v454 = vsel %vm437, 1, 0
        %v455 = vsel %vm438, 1, 0
        %v456 = vsel %vm439, 1, 0
        %v457 = vsel %vm440, 1, 0
        %v458 = vsel %vm441, 1, 0
        %v459 = vsel %vm442, 1, 0
        %v460 = vsel %vm443, 1, 0
        %v461 = vsel %vm444, 1, 0
        %v462 = vsel %vm445, 1, 0
        %v463 = vsel %vm446, 1, 0
        %v464 = vsel %vm447, 1, 0
        %v465 = vsel %vm448, 1, 0
        %v466 = vcvt.s32.f32 %v450
        %v467 = vcvt.s32.f32 %v451
        %v468 = vcvt.s32.f32 %v452
        %v469 = vcvt.s32.f32 %v453
        %v470 = vcvt.s32.f32 %v454
        %v471 = vcvt.s32.f32 %v455
        %v472 = vcvt.s32.f32 %v456
        %v473 = vcvt.s32.f32 %v457
        %v474 = vcvt.s32.f32 %v458
        %v475 = vcvt.s32.f32 %v459
        %v476 = vcvt.s32.f32 %v460
        %v477 = vcvt.s32.f32 %v461
        %v478 = vcvt.s32.f32 %v462
        %v479 = vcvt.s32.f32 %v463
        %v480 = vcvt.s32.f32 %v464
        %v481 = vcvt.s32.f32 %v465
        %vm482 = vcmask 1043456
        %v483 = vsel %vm482, %v466, 0.0
        %v484 = vsel %vm482, %v467, 0.0
        %v485 = vadd.f32 %v483, %v484
        %v486 = vsel %vm482, %v468, 0.0
        %v487 = vadd.f32 %v485, %v486
        %v488 = vsel %vm482, %v469, 0.0
        %v489 = vadd.f32 %v487, %v488
        %v490 = vsel %vm482, %v470, 0.0
        %v491 = vadd.f32 %v489, %v490
        %v492 = vsel %vm482, %v471, 0.0
        %v493 = vadd.f32 %v491, %v492
        %v494 = vsel %vm482, %v472, 0.0
        %v495 = vadd.f32 %v493, %v494
        %v496 = vsel %vm482, %v473, 0.0
        %v497 = vadd.f32 %v495, %v496
        %v498 = vsel %vm482, %v474, 0.0
        %v499 = vadd.f32 %v497, %v498
        %v500 = vsel %vm482, %v475, 0.0
        %v501 = vadd.f32 %v499, %v500
        %v502 = vsel %vm482, %v476, 0.0
        %v503 = vadd.f32 %v501, %v502
        %v504 = vsel %vm482, %v477, 0.0
        %v505 = vadd.f32 %v503, %v504
        %v506 = vsel %vm482, %v478, 0.0
        %v507 = vadd.f32 %v505, %v506
        %v508 = vsel %vm482, %v479, 0.0
        %v509 = vadd.f32 %v507, %v508
        %v510 = vsel %vm482, %v480, 0.0
        %v511 = vadd.f32 %v509, %v510
        %v512 = vsel %vm482, %v481, 0.0
        %v513 = vadd.f32 %v511, %v512
        %514 = vadd.xlane.f32.xlu0 %v513
        %v515 = vpop.xlane.xlu0 %514
        %v516 = vadd.f32 %v449, %v515
        %vm517 = vcmask 3072
        %518 = vst.msk [vmem:[%s303] sm:$0xf] %vm517, %v516
        %v519 = vld [vmem:[%s290] sm:$0xff]
        %v520 = vld [vmem:[%s290 + $0x8] sm:$0xff]
        %v521 = vld [vmem:[%s290 + $0x10] sm:$0xff]
        %v522 = vld [vmem:[%s290 + $0x18] sm:$0xff]
        %v523 = vld [vmem:[%s290 + $0x20] sm:$0xff]
        %v524 = vld [vmem:[%s290 + $0x28] sm:$0xff]
        %v525 = vld [vmem:[%s290 + $0x30] sm:$0xff]
        %v526 = vld [vmem:[%s290 + $0x38] sm:$0xff]
        %v527 = vld [vmem:[%s290 + $0x40] sm:$0xff]
        %v528 = vld [vmem:[%s290 + $0x48] sm:$0xff]
        %v529 = vld [vmem:[%s290 + $0x50] sm:$0xff]
        %v530 = vld [vmem:[%s290 + $0x58] sm:$0xff]
        %v531 = vld [vmem:[%s290 + $0x60] sm:$0xff]
        %v532 = vld [vmem:[%s290 + $0x68] sm:$0xff]
        %v533 = vld [vmem:[%s290 + $0x70] sm:$0xff]
        %v534 = vld [vmem:[%s290 + $0x78] sm:$0xff]
        %v535 = vld [vmem:[%s290 + $0x80] sm:$0xff]
        %v536 = vld [vmem:[%s290 + $0x88] sm:$0xff]
        %v537 = vld [vmem:[%s290 + $0x90] sm:$0xff]
        %v538 = vld [vmem:[%s290 + $0x98] sm:$0xff]
        %v539 = vld [vmem:[%s290 + $0xa0] sm:$0xff]
        %v540 = vld [vmem:[%s290 + $0xa8] sm:$0xff]
        %v541 = vld [vmem:[%s290 + $0xb0] sm:$0xff]
        %v542 = vld [vmem:[%s290 + $0xb8] sm:$0xff]
        %v543 = vld [vmem:[%s290 + $0xc0] sm:$0xff]
        %v544 = vld [vmem:[%s290 + $0xc8] sm:$0xff]
        %v545 = vld [vmem:[%s290 + $0xd0] sm:$0xff]
        %v546 = vld [vmem:[%s290 + $0xd8] sm:$0xff]
        %v547 = vld [vmem:[%s290 + $0xe0] sm:$0xff]
        %v548 = vld [vmem:[%s290 + $0xe8] sm:$0xff]
        %v549 = vld [vmem:[%s290 + $0xf0] sm:$0xff]
        %v550 = vld [vmem:[%s290 + $0xf8] sm:$0xff]
        %v551 = vld [vmem:[%s290 + $0x100] sm:$0xff]
        %v552 = vld [vmem:[%s290 + $0x108] sm:$0xff]
        %v553 = vld [vmem:[%s290 + $0x110] sm:$0xff]
        %v554 = vld [vmem:[%s290 + $0x118] sm:$0xff]
        %v555 = vld [vmem:[%s290 + $0x120] sm:$0xff]
        %v556 = vld [vmem:[%s290 + $0x128] sm:$0xff]
        %v557 = vld [vmem:[%s290 + $0x130] sm:$0xff]
        %v558 = vld [vmem:[%s290 + $0x138] sm:$0xff]
        %v559 = vld [vmem:[%s290 + $0x140] sm:$0xff]
        %v560 = vld [vmem:[%s290 + $0x148] sm:$0xff]
        %v561 = vld [vmem:[%s290 + $0x150] sm:$0xff]
        %v562 = vld [vmem:[%s290 + $0x158] sm:$0xff]
        %v563 = vld [vmem:[%s290 + $0x160] sm:$0xff]
        %v564 = vld [vmem:[%s290 + $0x168] sm:$0xff]
        %v565 = vld [vmem:[%s290 + $0x170] sm:$0xff]
        %v566 = vld [vmem:[%s290 + $0x178] sm:$0xff]
        %v567 = vld [vmem:[%s290 + $0x180] sm:$0xff]
        %v568 = vld [vmem:[%s290 + $0x188] sm:$0xff]
        %v569 = vld [vmem:[%s290 + $0x190] sm:$0xff]
        %v570 = vld [vmem:[%s290 + $0x198] sm:$0xff]
        %v571 = vld [vmem:[%s290 + $0x1a0] sm:$0xff]
        %v572 = vld [vmem:[%s290 + $0x1a8] sm:$0xff]
        %v573 = vld [vmem:[%s290 + $0x1b0] sm:$0xff]
        %v574 = vld [vmem:[%s290 + $0x1b8] sm:$0xff]
        %v575 = vld [vmem:[%s290 + $0x1c0] sm:$0xff]
        %v576 = vld [vmem:[%s290 + $0x1c8] sm:$0xff]
        %v577 = vld [vmem:[%s290 + $0x1d0] sm:$0xff]
        %v578 = vld [vmem:[%s290 + $0x1d8] sm:$0xff]
        %v579 = vld [vmem:[%s290 + $0x1e0] sm:$0xff]
        %v580 = vld [vmem:[%s290 + $0x1e8] sm:$0xff]
        %v581 = vld [vmem:[%s290 + $0x1f0] sm:$0xff]
        %v582 = vld [vmem:[%s290 + $0x1f8] sm:$0xff]
        %v583 = vld [vmem:[%s290 + $0x200] sm:$0xff]
        %v584 = vld [vmem:[%s290 + $0x208] sm:$0xff]
        %v585 = vld [vmem:[%s290 + $0x210] sm:$0xff]
        %v586 = vld [vmem:[%s290 + $0x218] sm:$0xff]
        %v587 = vld [vmem:[%s290 + $0x220] sm:$0xff]
        %v588 = vld [vmem:[%s290 + $0x228] sm:$0xff]
        %v589 = vld [vmem:[%s290 + $0x230] sm:$0xff]
        %v590 = vld [vmem:[%s290 + $0x238] sm:$0xff]
        %v591 = vld [vmem:[%s290 + $0x240] sm:$0xff]
        %v592 = vld [vmem:[%s290 + $0x248] sm:$0xff]
        %v593 = vld [vmem:[%s290 + $0x250] sm:$0xff]
        %v594 = vld [vmem:[%s290 + $0x258] sm:$0xff]
        %v595 = vld [vmem:[%s290 + $0x260] sm:$0xff]
        %v596 = vld [vmem:[%s290 + $0x268] sm:$0xff]
        %v597 = vld [vmem:[%s290 + $0x270] sm:$0xff]
        %v598 = vld [vmem:[%s290 + $0x278] sm:$0xff]
        %v599 = vld [vmem:[%s290 + $0x280] sm:$0xff]
        %v600 = vld [vmem:[%s290 + $0x288] sm:$0xff]
        %v601 = vld [vmem:[%s290 + $0x290] sm:$0xff]
        %v602 = vld [vmem:[%s290 + $0x298] sm:$0xff]
        %v603 = vld [vmem:[%s290 + $0x2a0] sm:$0xff]
        %v604 = vld [vmem:[%s290 + $0x2a8] sm:$0xff]
        %v605 = vld [vmem:[%s290 + $0x2b0] sm:$0xff]
        %v606 = vld [vmem:[%s290 + $0x2b8] sm:$0xff]
        %v607 = vld [vmem:[%s290 + $0x2c0] sm:$0xff]
        %v608 = vld [vmem:[%s290 + $0x2c8] sm:$0xff]
        %v609 = vld [vmem:[%s290 + $0x2d0] sm:$0xff]
        %v610 = vld [vmem:[%s290 + $0x2d8] sm:$0xff]
        %v611 = vld [vmem:[%s290 + $0x2e0] sm:$0xff]
        %v612 = vld [vmem:[%s290 + $0x2e8] sm:$0xff]
        %v613 = vld [vmem:[%s290 + $0x2f0] sm:$0xff]
        %v614 = vld [vmem:[%s290 + $0x2f8] sm:$0xff]
        %v615 = vld [vmem:[%s290 + $0x300] sm:$0xff]
        %v616 = vld [vmem:[%s290 + $0x308] sm:$0xff]
        %v617 = vld [vmem:[%s290 + $0x310] sm:$0xff]
        %v618 = vld [vmem:[%s290 + $0x318] sm:$0xff]
        %v619 = vld [vmem:[%s290 + $0x320] sm:$0xff]
        %v620 = vld [vmem:[%s290 + $0x328] sm:$0xff]
        %v621 = vld [vmem:[%s290 + $0x330] sm:$0xff]
        %v622 = vld [vmem:[%s290 + $0x338] sm:$0xff]
        %v623 = vld [vmem:[%s290 + $0x340] sm:$0xff]
        %v624 = vld [vmem:[%s290 + $0x348] sm:$0xff]
        %v625 = vld [vmem:[%s290 + $0x350] sm:$0xff]
        %v626 = vld [vmem:[%s290 + $0x358] sm:$0xff]
        %v627 = vld [vmem:[%s290 + $0x360] sm:$0xff]
        %v628 = vld [vmem:[%s290 + $0x368] sm:$0xff]
        %v629 = vld [vmem:[%s290 + $0x370] sm:$0xff]
        %v630 = vld [vmem:[%s290 + $0x378] sm:$0xff]
        %v631 = vld [vmem:[%s290 + $0x380] sm:$0xff]
        %v632 = vld [vmem:[%s290 + $0x388] sm:$0xff]
        %v633 = vld [vmem:[%s290 + $0x390] sm:$0xff]
        %v634 = vld [vmem:[%s290 + $0x398] sm:$0xff]
        %v635 = vld [vmem:[%s290 + $0x3a0] sm:$0xff]
        %v636 = vld [vmem:[%s290 + $0x3a8] sm:$0xff]
        %v637 = vld [vmem:[%s290 + $0x3b0] sm:$0xff]
        %v638 = vld [vmem:[%s290 + $0x3b8] sm:$0xff]
        %v639 = vld [vmem:[%s290 + $0x3c0] sm:$0xff]
        %v640 = vld [vmem:[%s290 + $0x3c8] sm:$0xff]
        %v641 = vld [vmem:[%s290 + $0x3d0] sm:$0xff]
        %v642 = vld [vmem:[%s290 + $0x3d8] sm:$0xff]
        %v643 = vld [vmem:[%s290 + $0x3e0] sm:$0xff]
        %v644 = vld [vmem:[%s290 + $0x3e8] sm:$0xff]
        %v645 = vld [vmem:[%s290 + $0x3f0] sm:$0xff]
        %v646 = vld [vmem:[%s290 + $0x3f8] sm:$0xff]
        %v647 = vld [vmem:[%s290 + $0x400] sm:$0xff]
        %v648 = vld [vmem:[%s290 + $0x408] sm:$0xff]
        %v649 = vld [vmem:[%s290 + $0x410] sm:$0xff]
        %v650 = vld [vmem:[%s290 + $0x418] sm:$0xff]
        %v651 = vld [vmem:[%s290 + $0x420] sm:$0xff]
        %v652 = vld [vmem:[%s290 + $0x428] sm:$0xff]
        %v653 = vld [vmem:[%s290 + $0x430] sm:$0xff]
        %v654 = vld [vmem:[%s290 + $0x438] sm:$0xff]
        %v655 = vld [vmem:[%s290 + $0x440] sm:$0xff]
        %v656 = vld [vmem:[%s290 + $0x448] sm:$0xff]
        %v657 = vld [vmem:[%s290 + $0x450] sm:$0xff]
        %v658 = vld [vmem:[%s290 + $0x458] sm:$0xff]
        %v659 = vld [vmem:[%s290 + $0x460] sm:$0xff]
        %v660 = vld [vmem:[%s290 + $0x468] sm:$0xff]
        %v661 = vld [vmem:[%s290 + $0x470] sm:$0xff]
        %v662 = vld [vmem:[%s290 + $0x478] sm:$0xff]
        %v663 = vld [vmem:[%s290 + $0x480] sm:$0xff]
        %v664 = vld [vmem:[%s290 + $0x488] sm:$0xff]
        %v665 = vld [vmem:[%s290 + $0x490] sm:$0xff]
        %v666 = vld [vmem:[%s290 + $0x498] sm:$0xff]
        %v667 = vld [vmem:[%s290 + $0x4a0] sm:$0xff]
        %v668 = vld [vmem:[%s290 + $0x4a8] sm:$0xff]
        %v669 = vld [vmem:[%s290 + $0x4b0] sm:$0xff]
        %v670 = vld [vmem:[%s290 + $0x4b8] sm:$0xff]
        %v671 = vld [vmem:[%s290 + $0x4c0] sm:$0xff]
        %v672 = vld [vmem:[%s290 + $0x4c8] sm:$0xff]
        %v673 = vld [vmem:[%s290 + $0x4d0] sm:$0xff]
        %v674 = vld [vmem:[%s290 + $0x4d8] sm:$0xff]
        %v675 = vld [vmem:[%s290 + $0x4e0] sm:$0xff]
        %v676 = vld [vmem:[%s290 + $0x4e8] sm:$0xff]
        %v677 = vld [vmem:[%s290 + $0x4f0] sm:$0xff]
        %v678 = vld [vmem:[%s290 + $0x4f8] sm:$0xff]
        %v679 = vld [vmem:[%s290 + $0x500] sm:$0xff]
        %v680 = vld [vmem:[%s290 + $0x508] sm:$0xff]
        %v681 = vld [vmem:[%s290 + $0x510] sm:$0xff]
        %v682 = vld [vmem:[%s290 + $0x518] sm:$0xff]
        %v683 = vld [vmem:[%s290 + $0x520] sm:$0xff]
        %v684 = vld [vmem:[%s290 + $0x528] sm:$0xff]
        %v685 = vld [vmem:[%s290 + $0x530] sm:$0xff]
        %v686 = vld [vmem:[%s290 + $0x538] sm:$0xff]
        %v687 = vld [vmem:[%s290 + $0x540] sm:$0xff]
        %v688 = vld [vmem:[%s290 + $0x548] sm:$0xff]
        %v689 = vld [vmem:[%s290 + $0x550] sm:$0xff]
        %v690 = vld [vmem:[%s290 + $0x558] sm:$0xff]
        %v691 = vld [vmem:[%s290 + $0x560] sm:$0xff]
        %v692 = vld [vmem:[%s290 + $0x568] sm:$0xff]
        %v693 = vld [vmem:[%s290 + $0x570] sm:$0xff]
        %v694 = vld [vmem:[%s290 + $0x578] sm:$0xff]
        %v695 = vld [vmem:[%s290 + $0x580] sm:$0xff]
        %v696 = vld [vmem:[%s290 + $0x588] sm:$0xff]
        %v697 = vld [vmem:[%s290 + $0x590] sm:$0xff]
        %v698 = vld [vmem:[%s290 + $0x598] sm:$0xff]
        %v699 = vld [vmem:[%s290 + $0x5a0] sm:$0xff]
        %v700 = vld [vmem:[%s290 + $0x5a8] sm:$0xff]
        %v701 = vld [vmem:[%s290 + $0x5b0] sm:$0xff]
        %v702 = vld [vmem:[%s290 + $0x5b8] sm:$0xff]
        %v703 = vld [vmem:[%s290 + $0x5c0] sm:$0xff]
        %v704 = vld [vmem:[%s290 + $0x5c8] sm:$0xff]
        %v705 = vld [vmem:[%s290 + $0x5d0] sm:$0xff]
        %v706 = vld [vmem:[%s290 + $0x5d8] sm:$0xff]
        %v707 = vld [vmem:[%s290 + $0x5e0] sm:$0xff]
        %v708 = vld [vmem:[%s290 + $0x5e8] sm:$0xff]
        %v709 = vld [vmem:[%s290 + $0x5f0] sm:$0xff]
        %v710 = vld [vmem:[%s290 + $0x5f8] sm:$0xff]
        %v711 = vld [vmem:[%s290 + $0x600] sm:$0xff]
        %v712 = vld [vmem:[%s290 + $0x608] sm:$0xff]
        %v713 = vld [vmem:[%s290 + $0x610] sm:$0xff]
        %v714 = vld [vmem:[%s290 + $0x618] sm:$0xff]
        %v715 = vld [vmem:[%s290 + $0x620] sm:$0xff]
        %v716 = vld [vmem:[%s290 + $0x628] sm:$0xff]
        %v717 = vld [vmem:[%s290 + $0x630] sm:$0xff]
        %v718 = vld [vmem:[%s290 + $0x638] sm:$0xff]
        %v719 = vld [vmem:[%s290 + $0x640] sm:$0xff]
        %v720 = vld [vmem:[%s290 + $0x648] sm:$0xff]
        %v721 = vld [vmem:[%s290 + $0x650] sm:$0xff]
        %v722 = vld [vmem:[%s290 + $0x658] sm:$0xff]
        %v723 = vld [vmem:[%s290 + $0x660] sm:$0xff]
        %v724 = vld [vmem:[%s290 + $0x668] sm:$0xff]
        %v725 = vld [vmem:[%s290 + $0x670] sm:$0xff]
        %v726 = vld [vmem:[%s290 + $0x678] sm:$0xff]
        %v727 = vld [vmem:[%s290 + $0x680] sm:$0xff]
        %v728 = vld [vmem:[%s290 + $0x688] sm:$0xff]
        %v729 = vld [vmem:[%s290 + $0x690] sm:$0xff]
        %v730 = vld [vmem:[%s290 + $0x698] sm:$0xff]
        %v731 = vld [vmem:[%s290 + $0x6a0] sm:$0xff]
        %v732 = vld [vmem:[%s290 + $0x6a8] sm:$0xff]
        %v733 = vld [vmem:[%s290 + $0x6b0] sm:$0xff]
        %v734 = vld [vmem:[%s290 + $0x6b8] sm:$0xff]
        %v735 = vld [vmem:[%s290 + $0x6c0] sm:$0xff]
        %v736 = vld [vmem:[%s290 + $0x6c8] sm:$0xff]
        %v737 = vld [vmem:[%s290 + $0x6d0] sm:$0xff]
        %v738 = vld [vmem:[%s290 + $0x6d8] sm:$0xff]
        %v739 = vld [vmem:[%s290 + $0x6e0] sm:$0xff]
        %v740 = vld [vmem:[%s290 + $0x6e8] sm:$0xff]
        %v741 = vld [vmem:[%s290 + $0x6f0] sm:$0xff]
        %v742 = vld [vmem:[%s290 + $0x6f8] sm:$0xff]
        %v743 = vld [vmem:[%s290 + $0x700] sm:$0xff]
        %v744 = vld [vmem:[%s290 + $0x708] sm:$0xff]
        %v745 = vld [vmem:[%s290 + $0x710] sm:$0xff]
        %v746 = vld [vmem:[%s290 + $0x718] sm:$0xff]
        %v747 = vld [vmem:[%s290 + $0x720] sm:$0xff]
        %v748 = vld [vmem:[%s290 + $0x728] sm:$0xff]
        %v749 = vld [vmem:[%s290 + $0x730] sm:$0xff]
        %v750 = vld [vmem:[%s290 + $0x738] sm:$0xff]
        %v751 = vld [vmem:[%s290 + $0x740] sm:$0xff]
        %v752 = vld [vmem:[%s290 + $0x748] sm:$0xff]
        %v753 = vld [vmem:[%s290 + $0x750] sm:$0xff]
        %v754 = vld [vmem:[%s290 + $0x758] sm:$0xff]
        %v755 = vld [vmem:[%s290 + $0x760] sm:$0xff]
        %v756 = vld [vmem:[%s290 + $0x768] sm:$0xff]
        %v757 = vld [vmem:[%s290 + $0x770] sm:$0xff]
        %v758 = vld [vmem:[%s290 + $0x778] sm:$0xff]
        %v759 = vld [vmem:[%s290 + $0x780] sm:$0xff]
        %v760 = vld [vmem:[%s290 + $0x788] sm:$0xff]
        %v761 = vld [vmem:[%s290 + $0x790] sm:$0xff]
        %v762 = vld [vmem:[%s290 + $0x798] sm:$0xff]
        %v763 = vld [vmem:[%s290 + $0x7a0] sm:$0xff]
        %v764 = vld [vmem:[%s290 + $0x7a8] sm:$0xff]
        %v765 = vld [vmem:[%s290 + $0x7b0] sm:$0xff]
        %v766 = vld [vmem:[%s290 + $0x7b8] sm:$0xff]
        %v767 = vld [vmem:[%s290 + $0x7c0] sm:$0xff]
        %v768 = vld [vmem:[%s290 + $0x7c8] sm:$0xff]
        %v769 = vld [vmem:[%s290 + $0x7d0] sm:$0xff]
        %v770 = vld [vmem:[%s290 + $0x7d8] sm:$0xff]
        %v771 = vld [vmem:[%s290 + $0x7e0] sm:$0xff]
        %v772 = vld [vmem:[%s290 + $0x7e8] sm:$0xff]
        %v773 = vld [vmem:[%s290 + $0x7f0] sm:$0xff]
        %v774 = vld [vmem:[%s290 + $0x7f8] sm:$0xff]
        %v775 = vadd.s32 %v368, 8
        %v776 = vadd.s32 %v368, 16
        %v777 = vadd.s32 %v368, 24
        %v778 = vadd.s32 %v368, 32
        %v779 = vadd.s32 %v368, 40
        %v780 = vadd.s32 %v368, 48
        %v781 = vadd.s32 %v368, 56
        %v782 = vadd.s32 %v368, 64
        %v783 = vadd.s32 %v368, 72
        %v784 = vadd.s32 %v368, 80
        %v785 = vadd.s32 %v368, 88
        %v786 = vadd.s32 %v368, 96
        %v787 = vadd.s32 %v368, 104
        %v788 = vadd.s32 %v368, 112
        %v789 = vadd.s32 %v368, 120
        %v790 = vadd.s32 %v368, 128
        %v791 = vadd.s32 %v368, 136
        %v792 = vadd.s32 %v368, 144
        %v793 = vadd.s32 %v368, 152
        %v794 = vadd.s32 %v368, 160
        %v795 = vadd.s32 %v368, 168
        %v796 = vadd.s32 %v368, 176
        %v797 = vadd.s32 %v368, 184
        %v798 = vadd.s32 %v368, 192
        %v799 = vadd.s32 %v368, 200
        %v800 = vadd.s32 %v368, 208
        %v801 = vadd.s32 %v368, 216
        %v802 = vadd.s32 %v368, 224
        %v803 = vadd.s32 %v368, 232
        %v804 = vadd.s32 %v368, 240
        %v805 = vadd.s32 %v368, 248
        %v806 = vadd.s32 %v368, 256
        %v807 = vadd.s32 %v368, 264
        %v808 = vadd.s32 %v368, 272
        %v809 = vadd.s32 %v368, 280
        %v810 = vadd.s32 %v368, 288
        %v811 = vadd.s32 %v368, 296
        %v812 = vadd.s32 %v368, 304
        %v813 = vadd.s32 %v368, 312
        %v814 = vadd.s32 %v368, 320
        %v815 = vadd.s32 %v368, 328
        %v816 = vadd.s32 %v368, 336
        %v817 = vadd.s32 %v368, 344
        %v818 = vadd.s32 %v368, 352
        %v819 = vadd.s32 %v368, 360
        %v820 = vadd.s32 %v368, 368
        %v821 = vadd.s32 %v368, 376
        %v822 = vadd.s32 %v368, 384
        %v823 = vadd.s32 %v368, 392
        %v824 = vadd.s32 %v368, 400
        %v825 = vadd.s32 %v368, 408
        %v826 = vadd.s32 %v368, 416
        %v827 = vadd.s32 %v368, 424
        %v828 = vadd.s32 %v368, 432
        %v829 = vadd.s32 %v368, 440
        %v830 = vadd.s32 %v368, 448
        %v831 = vadd.s32 %v368, 456
        %v832 = vadd.s32 %v368, 464
        %v833 = vadd.s32 %v368, 472
        %v834 = vadd.s32 %v368, 480
        %v835 = vadd.s32 %v368, 488
        %v836 = vadd.s32 %v368, 496
        %v837 = vadd.s32 %v368, 504
        %v838 = vadd.s32 %v368, 512
        %v839 = vadd.s32 %v368, 520
        %v840 = vadd.s32 %v368, 528
        %v841 = vadd.s32 %v368, 536
        %v842 = vadd.s32 %v368, 544
        %v843 = vadd.s32 %v368, 552
        %v844 = vadd.s32 %v368, 560
        %v845 = vadd.s32 %v368, 568
        %v846 = vadd.s32 %v368, 576
        %v847 = vadd.s32 %v368, 584
        %v848 = vadd.s32 %v368, 592
        %v849 = vadd.s32 %v368, 600
        %v850 = vadd.s32 %v368, 608
        %v851 = vadd.s32 %v368, 616
        %v852 = vadd.s32 %v368, 624
        %v853 = vadd.s32 %v368, 632
        %v854 = vadd.s32 %v368, 640
        %v855 = vadd.s32 %v368, 648
        %v856 = vadd.s32 %v368, 656
        %v857 = vadd.s32 %v368, 664
        %v858 = vadd.s32 %v368, 672
        %v859 = vadd.s32 %v368, 680
        %v860 = vadd.s32 %v368, 688
        %v861 = vadd.s32 %v368, 696
        %v862 = vadd.s32 %v368, 704
        %v863 = vadd.s32 %v368, 712
        %v864 = vadd.s32 %v368, 720
        %v865 = vadd.s32 %v368, 728
        %v866 = vadd.s32 %v368, 736
        %v867 = vadd.s32 %v368, 744
        %v868 = vadd.s32 %v368, 752
        %v869 = vadd.s32 %v368, 760
        %v870 = vadd.s32 %v368, 768
        %v871 = vadd.s32 %v368, 776
        %v872 = vadd.s32 %v368, 784
        %v873 = vadd.s32 %v368, 792
        %v874 = vadd.s32 %v368, 800
        %v875 = vadd.s32 %v368, 808
        %v876 = vadd.s32 %v368, 816
        %v877 = vadd.s32 %v368, 824
        %v878 = vadd.s32 %v368, 832
        %v879 = vadd.s32 %v368, 840
        %v880 = vadd.s32 %v368, 848
        %v881 = vadd.s32 %v368, 856
        %v882 = vadd.s32 %v368, 864
        %v883 = vadd.s32 %v368, 872
        %v884 = vadd.s32 %v368, 880
        %v885 = vadd.s32 %v368, 888
        %v886 = vadd.s32 %v368, 896
        %v887 = vadd.s32 %v368, 904
        %v888 = vadd.s32 %v368, 912
        %v889 = vadd.s32 %v368, 920
        %v890 = vadd.s32 %v368, 928
        %v891 = vadd.s32 %v368, 936
        %v892 = vadd.s32 %v368, 944
        %v893 = vadd.s32 %v368, 952
        %v894 = vadd.s32 %v368, 960
        %v895 = vadd.s32 %v368, 968
        %v896 = vadd.s32 %v368, 976
        %v897 = vadd.s32 %v368, 984
        %v898 = vadd.s32 %v368, 992
        %v899 = vadd.s32 %v368, 1000
        %v900 = vadd.s32 %v368, 1008
        %v901 = vadd.s32 %v368, 1016
        %v902 = vadd.s32 %v368, 1024
        %v903 = vadd.s32 %v368, 1032
        %v904 = vadd.s32 %v368, 1040
        %v905 = vadd.s32 %v368, 1048
        %v906 = vadd.s32 %v368, 1056
        %v907 = vadd.s32 %v368, 1064
        %v908 = vadd.s32 %v368, 1072
        %v909 = vadd.s32 %v368, 1080
        %v910 = vadd.s32 %v368, 1088
        %v911 = vadd.s32 %v368, 1096
        %v912 = vadd.s32 %v368, 1104
        %v913 = vadd.s32 %v368, 1112
        %v914 = vadd.s32 %v368, 1120
        %v915 = vadd.s32 %v368, 1128
        %v916 = vadd.s32 %v368, 1136
        %v917 = vadd.s32 %v368, 1144
        %v918 = vadd.s32 %v368, 1152
        %v919 = vadd.s32 %v368, 1160
        %v920 = vadd.s32 %v368, 1168
        %v921 = vadd.s32 %v368, 1176
        %v922 = vadd.s32 %v368, 1184
        %v923 = vadd.s32 %v368, 1192
        %v924 = vadd.s32 %v368, 1200
        %v925 = vadd.s32 %v368, 1208
        %v926 = vadd.s32 %v368, 1216
        %v927 = vadd.s32 %v368, 1224
        %v928 = vadd.s32 %v368, 1232
        %v929 = vadd.s32 %v368, 1240
        %v930 = vadd.s32 %v368, 1248
        %v931 = vadd.s32 %v368, 1256
        %v932 = vadd.s32 %v368, 1264
        %v933 = vadd.s32 %v368, 1272
        %v934 = vadd.s32 %v368, 1280
        %v935 = vadd.s32 %v368, 1288
        %v936 = vadd.s32 %v368, 1296
        %v937 = vadd.s32 %v368, 1304
        %v938 = vadd.s32 %v368, 1312
        %v939 = vadd.s32 %v368, 1320
        %v940 = vadd.s32 %v368, 1328
        %v941 = vadd.s32 %v368, 1336
        %v942 = vadd.s32 %v368, 1344
        %v943 = vadd.s32 %v368, 1352
        %v944 = vadd.s32 %v368, 1360
        %v945 = vadd.s32 %v368, 1368
        %v946 = vadd.s32 %v368, 1376
        %v947 = vadd.s32 %v368, 1384
        %v948 = vadd.s32 %v368, 1392
        %v949 = vadd.s32 %v368, 1400
        %v950 = vadd.s32 %v368, 1408
        %v951 = vadd.s32 %v368, 1416
        %v952 = vadd.s32 %v368, 1424
        %v953 = vadd.s32 %v368, 1432
        %v954 = vadd.s32 %v368, 1440
        %v955 = vadd.s32 %v368, 1448
        %v956 = vadd.s32 %v368, 1456
        %v957 = vadd.s32 %v368, 1464
        %v958 = vadd.s32 %v368, 1472
        %v959 = vadd.s32 %v368, 1480
        %v960 = vadd.s32 %v368, 1488
        %v961 = vadd.s32 %v368, 1496
        %v962 = vadd.s32 %v368, 1504
        %v963 = vadd.s32 %v368, 1512
        %v964 = vadd.s32 %v368, 1520
        %v965 = vadd.s32 %v368, 1528
        %v966 = vadd.s32 %v368, 1536
        %v967 = vadd.s32 %v368, 1544
        %v968 = vadd.s32 %v368, 1552
        %v969 = vadd.s32 %v368, 1560
        %v970 = vadd.s32 %v368, 1568
        %v971 = vadd.s32 %v368, 1576
        %v972 = vadd.s32 %v368, 1584
        %v973 = vadd.s32 %v368, 1592
        %v974 = vadd.s32 %v368, 1600
        %v975 = vadd.s32 %v368, 1608
        %v976 = vadd.s32 %v368, 1616
        %v977 = vadd.s32 %v368, 1624
        %v978 = vadd.s32 %v368, 1632
        %v979 = vadd.s32 %v368, 1640
        %v980 = vadd.s32 %v368, 1648
        %v981 = vadd.s32 %v368, 1656
        %v982 = vadd.s32 %v368, 1664
        %v983 = vadd.s32 %v368, 1672
        %v984 = vadd.s32 %v368, 1680
        %v985 = vadd.s32 %v368, 1688
        %v986 = vadd.s32 %v368, 1696
        %v987 = vadd.s32 %v368, 1704
        %v988 = vadd.s32 %v368, 1712
        %v989 = vadd.s32 %v368, 1720
        %v990 = vadd.s32 %v368, 1728
        %v991 = vadd.s32 %v368, 1736
        %v992 = vadd.s32 %v368, 1744
        %v993 = vadd.s32 %v368, 1752
        %v994 = vadd.s32 %v368, 1760
        %v995 = vadd.s32 %v368, 1768
        %v996 = vadd.s32 %v368, 1776
        %v997 = vadd.s32 %v368, 1784
        %v998 = vadd.s32 %v368, 1792
        %v999 = vadd.s32 %v368, 1800
        %v1000 = vadd.s32 %v368, 1808
        %v1001 = vadd.s32 %v368, 1816
        %v1002 = vadd.s32 %v368, 1824
        %v1003 = vadd.s32 %v368, 1832
        %v1004 = vadd.s32 %v368, 1840
        %v1005 = vadd.s32 %v368, 1848
        %v1006 = vadd.s32 %v368, 1856
        %v1007 = vadd.s32 %v368, 1864
        %v1008 = vadd.s32 %v368, 1872
        %v1009 = vadd.s32 %v368, 1880
        %v1010 = vadd.s32 %v368, 1888
        %v1011 = vadd.s32 %v368, 1896
        %v1012 = vadd.s32 %v368, 1904
        %v1013 = vadd.s32 %v368, 1912
        %v1014 = vadd.s32 %v368, 1920
        %v1015 = vadd.s32 %v368, 1928
        %v1016 = vadd.s32 %v368, 1936
        %v1017 = vadd.s32 %v368, 1944
        %v1018 = vadd.s32 %v368, 1952
        %v1019 = vadd.s32 %v368, 1960
        %v1020 = vadd.s32 %v368, 1968
        %v1021 = vadd.s32 %v368, 1976
        %v1022 = vadd.s32 %v368, 1984
        %v1023 = vadd.s32 %v368, 1992
        %v1024 = vadd.s32 %v368, 2000
        %v1025 = vadd.s32 %v368, 2008
        %v1026 = vadd.s32 %v368, 2016
        %v1027 = vadd.s32 %v368, 2024
        %v1028 = vadd.s32 %v368, 2032
        %v1029 = vadd.s32 %v368, 2040
        %v1030 = vadd.s32 %v334, %v368
        %v1031 = vadd.s32 %v334, %v775
        %v1032 = vadd.s32 %v334, %v776
        %v1033 = vadd.s32 %v334, %v777
        %v1034 = vadd.s32 %v334, %v778
        %v1035 = vadd.s32 %v334, %v779
        %v1036 = vadd.s32 %v334, %v780
        %v1037 = vadd.s32 %v334, %v781
        %v1038 = vadd.s32 %v334, %v782
        %v1039 = vadd.s32 %v334, %v783
        %v1040 = vadd.s32 %v334, %v784
        %v1041 = vadd.s32 %v334, %v785
        %v1042 = vadd.s32 %v334, %v786
        %v1043 = vadd.s32 %v334, %v787
        %v1044 = vadd.s32 %v334, %v788
        %v1045 = vadd.s32 %v334, %v789
        %v1046 = vadd.s32 %v334, %v790
        %v1047 = vadd.s32 %v334, %v791
        %v1048 = vadd.s32 %v334, %v792
        %v1049 = vadd.s32 %v334, %v793
        %v1050 = vadd.s32 %v334, %v794
        %v1051 = vadd.s32 %v334, %v795
        %v1052 = vadd.s32 %v334, %v796
        %v1053 = vadd.s32 %v334, %v797
        %v1054 = vadd.s32 %v334, %v798
        %v1055 = vadd.s32 %v334, %v799
        %v1056 = vadd.s32 %v334, %v800
        %v1057 = vadd.s32 %v334, %v801
        %v1058 = vadd.s32 %v334, %v802
        %v1059 = vadd.s32 %v334, %v803
        %v1060 = vadd.s32 %v334, %v804
        %v1061 = vadd.s32 %v334, %v805
        %v1062 = vadd.s32 %v334, %v806
        %v1063 = vadd.s32 %v334, %v807
        %v1064 = vadd.s32 %v334, %v808
        %v1065 = vadd.s32 %v334, %v809
        %v1066 = vadd.s32 %v334, %v810
        %v1067 = vadd.s32 %v334, %v811
        %v1068 = vadd.s32 %v334, %v812
        %v1069 = vadd.s32 %v334, %v813
        %v1070 = vadd.s32 %v334, %v814
        %v1071 = vadd.s32 %v334, %v815
        %v1072 = vadd.s32 %v334, %v816
        %v1073 = vadd.s32 %v334, %v817
        %v1074 = vadd.s32 %v334, %v818
        %v1075 = vadd.s32 %v334, %v819
        %v1076 = vadd.s32 %v334, %v820
        %v1077 = vadd.s32 %v334, %v821
        %v1078 = vadd.s32 %v334, %v822
        %v1079 = vadd.s32 %v334, %v823
        %v1080 = vadd.s32 %v334, %v824
        %v1081 = vadd.s32 %v334, %v825
        %v1082 = vadd.s32 %v334, %v826
        %v1083 = vadd.s32 %v334, %v827
        %v1084 = vadd.s32 %v334, %v828
        %v1085 = vadd.s32 %v334, %v829
        %v1086 = vadd.s32 %v334, %v830
        %v1087 = vadd.s32 %v334, %v831
        %v1088 = vadd.s32 %v334, %v832
        %v1089 = vadd.s32 %v334, %v833
        %v1090 = vadd.s32 %v334, %v834
        %v1091 = vadd.s32 %v334, %v835
        %v1092 = vadd.s32 %v334, %v836
        %v1093 = vadd.s32 %v334, %v837
        %v1094 = vadd.s32 %v334, %v838
        %v1095 = vadd.s32 %v334, %v839
        %v1096 = vadd.s32 %v334, %v840
        %v1097 = vadd.s32 %v334, %v841
        %v1098 = vadd.s32 %v334, %v842
        %v1099 = vadd.s32 %v334, %v843
        %v1100 = vadd.s32 %v334, %v844
        %v1101 = vadd.s32 %v334, %v845
        %v1102 = vadd.s32 %v334, %v846
        %v1103 = vadd.s32 %v334, %v847
        %v1104 = vadd.s32 %v334, %v848
        %v1105 = vadd.s32 %v334, %v849
        %v1106 = vadd.s32 %v334, %v850
        %v1107 = vadd.s32 %v334, %v851
        %v1108 = vadd.s32 %v334, %v852
        %v1109 = vadd.s32 %v334, %v853
        %v1110 = vadd.s32 %v334, %v854
        %v1111 = vadd.s32 %v334, %v855
        %v1112 = vadd.s32 %v334, %v856
        %v1113 = vadd.s32 %v334, %v857
        %v1114 = vadd.s32 %v334, %v858
        %v1115 = vadd.s32 %v334, %v859
        %v1116 = vadd.s32 %v334, %v860
        %v1117 = vadd.s32 %v334, %v861
        %v1118 = vadd.s32 %v334, %v862
        %v1119 = vadd.s32 %v334, %v863
        %v1120 = vadd.s32 %v334, %v864
        %v1121 = vadd.s32 %v334, %v865
        %v1122 = vadd.s32 %v334, %v866
        %v1123 = vadd.s32 %v334, %v867
        %v1124 = vadd.s32 %v334, %v868
        %v1125 = vadd.s32 %v334, %v869
        %v1126 = vadd.s32 %v334, %v870
        %v1127 = vadd.s32 %v334, %v871
        %v1128 = vadd.s32 %v334, %v872
        %v1129 = vadd.s32 %v334, %v873
        %v1130 = vadd.s32 %v334, %v874
        %v1131 = vadd.s32 %v334, %v875
        %v1132 = vadd.s32 %v334, %v876
        %v1133 = vadd.s32 %v334, %v877
        %v1134 = vadd.s32 %v334, %v878
        %v1135 = vadd.s32 %v334, %v879
        %v1136 = vadd.s32 %v334, %v880
        %v1137 = vadd.s32 %v334, %v881
        %v1138 = vadd.s32 %v334, %v882
        %v1139 = vadd.s32 %v334, %v883
        %v1140 = vadd.s32 %v334, %v884
        %v1141 = vadd.s32 %v334, %v885
        %v1142 = vadd.s32 %v334, %v886
        %v1143 = vadd.s32 %v334, %v887
        %v1144 = vadd.s32 %v334, %v888
        %v1145 = vadd.s32 %v334, %v889
        %v1146 = vadd.s32 %v334, %v890
        %v1147 = vadd.s32 %v334, %v891
        %v1148 = vadd.s32 %v334, %v892
        %v1149 = vadd.s32 %v334, %v893
        %v1150 = vadd.s32 %v334, %v894
        %v1151 = vadd.s32 %v334, %v895
        %v1152 = vadd.s32 %v334, %v896
        %v1153 = vadd.s32 %v334, %v897
        %v1154 = vadd.s32 %v334, %v898
        %v1155 = vadd.s32 %v334, %v899
        %v1156 = vadd.s32 %v334, %v900
        %v1157 = vadd.s32 %v334, %v901
        %v1158 = vadd.s32 %v334, %v902
        %v1159 = vadd.s32 %v334, %v903
        %v1160 = vadd.s32 %v334, %v904
        %v1161 = vadd.s32 %v334, %v905
        %v1162 = vadd.s32 %v334, %v906
        %v1163 = vadd.s32 %v334, %v907
        %v1164 = vadd.s32 %v334, %v908
        %v1165 = vadd.s32 %v334, %v909
        %v1166 = vadd.s32 %v334, %v910
        %v1167 = vadd.s32 %v334, %v911
        %v1168 = vadd.s32 %v334, %v912
        %v1169 = vadd.s32 %v334, %v913
        %v1170 = vadd.s32 %v334, %v914
        %v1171 = vadd.s32 %v334, %v915
        %v1172 = vadd.s32 %v334, %v916
        %v1173 = vadd.s32 %v334, %v917
        %v1174 = vadd.s32 %v334, %v918
        %v1175 = vadd.s32 %v334, %v919
        %v1176 = vadd.s32 %v334, %v920
        %v1177 = vadd.s32 %v334, %v921
        %v1178 = vadd.s32 %v334, %v922
        %v1179 = vadd.s32 %v334, %v923
        %v1180 = vadd.s32 %v334, %v924
        %v1181 = vadd.s32 %v334, %v925
        %v1182 = vadd.s32 %v334, %v926
        %v1183 = vadd.s32 %v334, %v927
        %v1184 = vadd.s32 %v334, %v928
        %v1185 = vadd.s32 %v334, %v929
        %v1186 = vadd.s32 %v334, %v930
        %v1187 = vadd.s32 %v334, %v931
        %v1188 = vadd.s32 %v334, %v932
        %v1189 = vadd.s32 %v334, %v933
        %v1190 = vadd.s32 %v334, %v934
        %v1191 = vadd.s32 %v334, %v935
        %v1192 = vadd.s32 %v334, %v936
        %v1193 = vadd.s32 %v334, %v937
        %v1194 = vadd.s32 %v334, %v938
        %v1195 = vadd.s32 %v334, %v939
        %v1196 = vadd.s32 %v334, %v940
        %v1197 = vadd.s32 %v334, %v941
        %v1198 = vadd.s32 %v334, %v942
        %v1199 = vadd.s32 %v334, %v943
        %v1200 = vadd.s32 %v334, %v944
        %v1201 = vadd.s32 %v334, %v945
        %v1202 = vadd.s32 %v334, %v946
        %v1203 = vadd.s32 %v334, %v947
        %v1204 = vadd.s32 %v334, %v948
        %v1205 = vadd.s32 %v334, %v949
        %v1206 = vadd.s32 %v334, %v950
        %v1207 = vadd.s32 %v334, %v951
        %v1208 = vadd.s32 %v334, %v952
        %v1209 = vadd.s32 %v334, %v953
        %v1210 = vadd.s32 %v334, %v954
        %v1211 = vadd.s32 %v334, %v955
        %v1212 = vadd.s32 %v334, %v956
        %v1213 = vadd.s32 %v334, %v957
        %v1214 = vadd.s32 %v334, %v958
        %v1215 = vadd.s32 %v334, %v959
        %v1216 = vadd.s32 %v334, %v960
        %v1217 = vadd.s32 %v334, %v961
        %v1218 = vadd.s32 %v334, %v962
        %v1219 = vadd.s32 %v334, %v963
        %v1220 = vadd.s32 %v334, %v964
        %v1221 = vadd.s32 %v334, %v965
        %v1222 = vadd.s32 %v334, %v966
        %v1223 = vadd.s32 %v334, %v967
        %v1224 = vadd.s32 %v334, %v968
        %v1225 = vadd.s32 %v334, %v969
        %v1226 = vadd.s32 %v334, %v970
        %v1227 = vadd.s32 %v334, %v971
        %v1228 = vadd.s32 %v334, %v972
        %v1229 = vadd.s32 %v334, %v973
        %v1230 = vadd.s32 %v334, %v974
        %v1231 = vadd.s32 %v334, %v975
        %v1232 = vadd.s32 %v334, %v976
        %v1233 = vadd.s32 %v334, %v977
        %v1234 = vadd.s32 %v334, %v978
        %v1235 = vadd.s32 %v334, %v979
        %v1236 = vadd.s32 %v334, %v980
        %v1237 = vadd.s32 %v334, %v981
        %v1238 = vadd.s32 %v334, %v982
        %v1239 = vadd.s32 %v334, %v983
        %v1240 = vadd.s32 %v334, %v984
        %v1241 = vadd.s32 %v334, %v985
        %v1242 = vadd.s32 %v334, %v986
        %v1243 = vadd.s32 %v334, %v987
        %v1244 = vadd.s32 %v334, %v988
        %v1245 = vadd.s32 %v334, %v989
        %v1246 = vadd.s32 %v334, %v990
        %v1247 = vadd.s32 %v334, %v991
        %v1248 = vadd.s32 %v334, %v992
        %v1249 = vadd.s32 %v334, %v993
        %v1250 = vadd.s32 %v334, %v994
        %v1251 = vadd.s32 %v334, %v995
        %v1252 = vadd.s32 %v334, %v996
        %v1253 = vadd.s32 %v334, %v997
        %v1254 = vadd.s32 %v334, %v998
        %v1255 = vadd.s32 %v334, %v999
        %v1256 = vadd.s32 %v334, %v1000
        %v1257 = vadd.s32 %v334, %v1001
        %v1258 = vadd.s32 %v334, %v1002
        %v1259 = vadd.s32 %v334, %v1003
        %v1260 = vadd.s32 %v334, %v1004
        %v1261 = vadd.s32 %v334, %v1005
        %v1262 = vadd.s32 %v334, %v1006
        %v1263 = vadd.s32 %v334, %v1007
        %v1264 = vadd.s32 %v334, %v1008
        %v1265 = vadd.s32 %v334, %v1009
        %v1266 = vadd.s32 %v334, %v1010
        %v1267 = vadd.s32 %v334, %v1011
        %v1268 = vadd.s32 %v334, %v1012
        %v1269 = vadd.s32 %v334, %v1013
        %v1270 = vadd.s32 %v334, %v1014
        %v1271 = vadd.s32 %v334, %v1015
        %v1272 = vadd.s32 %v334, %v1016
        %v1273 = vadd.s32 %v334, %v1017
        %v1274 = vadd.s32 %v334, %v1018
        %v1275 = vadd.s32 %v334, %v1019
        %v1276 = vadd.s32 %v334, %v1020
        %v1277 = vadd.s32 %v334, %v1021
        %v1278 = vadd.s32 %v334, %v1022
        %v1279 = vadd.s32 %v334, %v1023
        %v1280 = vadd.s32 %v334, %v1024
        %v1281 = vadd.s32 %v334, %v1025
        %v1282 = vadd.s32 %v334, %v1026
        %v1283 = vadd.s32 %v334, %v1027
        %v1284 = vadd.s32 %v334, %v1028
        %v1285 = vadd.s32 %v334, %v1029
        %vm1286 = vcmp.lt.s32.totalorder %v1030, 5000
        %vm1287 = vcmp.lt.s32.totalorder %v1031, 5000
        %vm1288 = vcmp.lt.s32.totalorder %v1032, 5000
        %vm1289 = vcmp.lt.s32.totalorder %v1033, 5000
        %vm1290 = vcmp.lt.s32.totalorder %v1034, 5000
        %vm1291 = vcmp.lt.s32.totalorder %v1035, 5000
        %vm1292 = vcmp.lt.s32.totalorder %v1036, 5000
        %vm1293 = vcmp.lt.s32.totalorder %v1037, 5000
        %vm1294 = vcmp.lt.s32.totalorder %v1038, 5000
        %vm1295 = vcmp.lt.s32.totalorder %v1039, 5000
        %vm1296 = vcmp.lt.s32.totalorder %v1040, 5000
        %vm1297 = vcmp.lt.s32.totalorder %v1041, 5000
        %vm1298 = vcmp.lt.s32.totalorder %v1042, 5000
        %vm1299 = vcmp.lt.s32.totalorder %v1043, 5000
        %vm1300 = vcmp.lt.s32.totalorder %v1044, 5000
        %vm1301 = vcmp.lt.s32.totalorder %v1045, 5000
        %vm1302 = vcmp.lt.s32.totalorder %v1046, 5000
        %vm1303 = vcmp.lt.s32.totalorder %v1047, 5000
        %vm1304 = vcmp.lt.s32.totalorder %v1048, 5000
        %vm1305 = vcmp.lt.s32.totalorder %v1049, 5000
        %vm1306 = vcmp.lt.s32.totalorder %v1050, 5000
        %vm1307 = vcmp.lt.s32.totalorder %v1051, 5000
        %vm1308 = vcmp.lt.s32.totalorder %v1052, 5000
        %vm1309 = vcmp.lt.s32.totalorder %v1053, 5000
        %vm1310 = vcmp.lt.s32.totalorder %v1054, 5000
        %vm1311 = vcmp.lt.s32.totalorder %v1055, 5000
        %vm1312 = vcmp.lt.s32.totalorder %v1056, 5000
        %vm1313 = vcmp.lt.s32.totalorder %v1057, 5000
        %vm1314 = vcmp.lt.s32.totalorder %v1058, 5000
        %vm1315 = vcmp.lt.s32.totalorder %v1059, 5000
        %vm1316 = vcmp.lt.s32.totalorder %v1060, 5000
        %vm1317 = vcmp.lt.s32.totalorder %v1061, 5000
        %vm1318 = vcmp.lt.s32.totalorder %v1062, 5000
        %vm1319 = vcmp.lt.s32.totalorder %v1063, 5000
        %vm1320 = vcmp.lt.s32.totalorder %v1064, 5000
        %vm1321 = vcmp.lt.s32.totalorder %v1065, 5000
        %vm1322 = vcmp.lt.s32.totalorder %v1066, 5000
        %vm1323 = vcmp.lt.s32.totalorder %v1067, 5000
        %vm1324 = vcmp.lt.s32.totalorder %v1068, 5000
        %vm1325 = vcmp.lt.s32.totalorder %v1069, 5000
        %vm1326 = vcmp.lt.s32.totalorder %v1070, 5000
        %vm1327 = vcmp.lt.s32.totalorder %v1071, 5000
        %vm1328 = vcmp.lt.s32.totalorder %v1072, 5000
        %vm1329 = vcmp.lt.s32.totalorder %v1073, 5000
        %vm1330 = vcmp.lt.s32.totalorder %v1074, 5000
        %vm1331 = vcmp.lt.s32.totalorder %v1075, 5000
        %vm1332 = vcmp.lt.s32.totalorder %v1076, 5000
        %vm1333 = vcmp.lt.s32.totalorder %v1077, 5000
        %vm1334 = vcmp.lt.s32.totalorder %v1078, 5000
        %vm1335 = vcmp.lt.s32.totalorder %v1079, 5000
        %vm1336 = vcmp.lt.s32.totalorder %v1080, 5000
        %vm1337 = vcmp.lt.s32.totalorder %v1081, 5000
        %vm1338 = vcmp.lt.s32.totalorder %v1082, 5000
        %vm1339 = vcmp.lt.s32.totalorder %v1083, 5000
        %vm1340 = vcmp.lt.s32.totalorder %v1084, 5000
        %vm1341 = vcmp.lt.s32.totalorder %v1085, 5000
        %vm1342 = vcmp.lt.s32.totalorder %v1086, 5000
        %vm1343 = vcmp.lt.s32.totalorder %v1087, 5000
        %vm1344 = vcmp.lt.s32.totalorder %v1088, 5000
        %vm1345 = vcmp.lt.s32.totalorder %v1089, 5000
        %vm1346 = vcmp.lt.s32.totalorder %v1090, 5000
        %vm1347 = vcmp.lt.s32.totalorder %v1091, 5000
        %vm1348 = vcmp.lt.s32.totalorder %v1092, 5000
        %vm1349 = vcmp.lt.s32.totalorder %v1093, 5000
        %vm1350 = vcmp.lt.s32.totalorder %v1094, 5000
        %vm1351 = vcmp.lt.s32.totalorder %v1095, 5000
        %vm1352 = vcmp.lt.s32.totalorder %v1096, 5000
        %vm1353 = vcmp.lt.s32.totalorder %v1097, 5000
        %vm1354 = vcmp.lt.s32.totalorder %v1098, 5000
        %vm1355 = vcmp.lt.s32.totalorder %v1099, 5000
        %vm1356 = vcmp.lt.s32.totalorder %v1100, 5000
        %vm1357 = vcmp.lt.s32.totalorder %v1101, 5000
        %vm1358 = vcmp.lt.s32.totalorder %v1102, 5000
        %vm1359 = vcmp.lt.s32.totalorder %v1103, 5000
        %vm1360 = vcmp.lt.s32.totalorder %v1104, 5000
        %vm1361 = vcmp.lt.s32.totalorder %v1105, 5000
        %vm1362 = vcmp.lt.s32.totalorder %v1106, 5000
        %vm1363 = vcmp.lt.s32.totalorder %v1107, 5000
        %vm1364 = vcmp.lt.s32.totalorder %v1108, 5000
        %vm1365 = vcmp.lt.s32.totalorder %v1109, 5000
        %vm1366 = vcmp.lt.s32.totalorder %v1110, 5000
        %vm1367 = vcmp.lt.s32.totalorder %v1111, 5000
        %vm1368 = vcmp.lt.s32.totalorder %v1112, 5000
        %vm1369 = vcmp.lt.s32.totalorder %v1113, 5000
        %vm1370 = vcmp.lt.s32.totalorder %v1114, 5000
        %vm1371 = vcmp.lt.s32.totalorder %v1115, 5000
        %vm1372 = vcmp.lt.s32.totalorder %v1116, 5000
        %vm1373 = vcmp.lt.s32.totalorder %v1117, 5000
        %vm1374 = vcmp.lt.s32.totalorder %v1118, 5000
        %vm1375 = vcmp.lt.s32.totalorder %v1119, 5000
        %vm1376 = vcmp.lt.s32.totalorder %v1120, 5000
        %vm1377 = vcmp.lt.s32.totalorder %v1121, 5000
        %vm1378 = vcmp.lt.s32.totalorder %v1122, 5000
        %vm1379 = vcmp.lt.s32.totalorder %v1123, 5000
        %vm1380 = vcmp.lt.s32.totalorder %v1124, 5000
        %vm1381 = vcmp.lt.s32.totalorder %v1125, 5000
        %vm1382 = vcmp.lt.s32.totalorder %v1126, 5000
        %vm1383 = vcmp.lt.s32.totalorder %v1127, 5000
        %vm1384 = vcmp.lt.s32.totalorder %v1128, 5000
        %vm1385 = vcmp.lt.s32.totalorder %v1129, 5000
        %vm1386 = vcmp.lt.s32.totalorder %v1130, 5000
        %vm1387 = vcmp.lt.s32.totalorder %v1131, 5000
        %vm1388 = vcmp.lt.s32.totalorder %v1132, 5000
        %vm1389 = vcmp.lt.s32.totalorder %v1133, 5000
        %vm1390 = vcmp.lt.s32.totalorder %v1134, 5000
        %vm1391 = vcmp.lt.s32.totalorder %v1135, 5000
        %vm1392 = vcmp.lt.s32.totalorder %v1136, 5000
        %vm1393 = vcmp.lt.s32.totalorder %v1137, 5000
        %vm1394 = vcmp.lt.s32.totalorder %v1138, 5000
        %vm1395 = vcmp.lt.s32.totalorder %v1139, 5000
        %vm1396 = vcmp.lt.s32.totalorder %v1140, 5000
        %vm1397 = vcmp.lt.s32.totalorder %v1141, 5000
        %vm1398 = vcmp.lt.s32.totalorder %v1142, 5000
        %vm1399 = vcmp.lt.s32.totalorder %v1143, 5000
        %vm1400 = vcmp.lt.s32.totalorder %v1144, 5000
        %vm1401 = vcmp.lt.s32.totalorder %v1145, 5000
        %vm1402 = vcmp.lt.s32.totalorder %v1146, 5000
        %vm1403 = vcmp.lt.s32.totalorder %v1147, 5000
        %vm1404 = vcmp.lt.s32.totalorder %v1148, 5000
        %vm1405 = vcmp.lt.s32.totalorder %v1149, 5000
        %vm1406 = vcmp.lt.s32.totalorder %v1150, 5000
        %vm1407 = vcmp.lt.s32.totalorder %v1151, 5000
        %vm1408 = vcmp.lt.s32.totalorder %v1152, 5000
        %vm1409 = vcmp.lt.s32.totalorder %v1153, 5000
        %vm1410 = vcmp.lt.s32.totalorder %v1154, 5000
        %vm1411 = vcmp.lt.s32.totalorder %v1155, 5000
        %vm1412 = vcmp.lt.s32.totalorder %v1156, 5000
        %vm1413 = vcmp.lt.s32.totalorder %v1157, 5000
        %vm1414 = vcmp.lt.s32.totalorder %v1158, 5000
        %vm1415 = vcmp.lt.s32.totalorder %v1159, 5000
        %vm1416 = vcmp.lt.s32.totalorder %v1160, 5000
        %vm1417 = vcmp.lt.s32.totalorder %v1161, 5000
        %vm1418 = vcmp.lt.s32.totalorder %v1162, 5000
        %vm1419 = vcmp.lt.s32.totalorder %v1163, 5000
        %vm1420 = vcmp.lt.s32.totalorder %v1164, 5000
        %vm1421 = vcmp.lt.s32.totalorder %v1165, 5000
        %vm1422 = vcmp.lt.s32.totalorder %v1166, 5000
        %vm1423 = vcmp.lt.s32.totalorder %v1167, 5000
        %vm1424 = vcmp.lt.s32.totalorder %v1168, 5000
        %vm1425 = vcmp.lt.s32.totalorder %v1169, 5000
        %vm1426 = vcmp.lt.s32.totalorder %v1170, 5000
        %vm1427 = vcmp.lt.s32.totalorder %v1171, 5000
        %vm1428 = vcmp.lt.s32.totalorder %v1172, 5000
        %vm1429 = vcmp.lt.s32.totalorder %v1173, 5000
        %vm1430 = vcmp.lt.s32.totalorder %v1174, 5000
        %vm1431 = vcmp.lt.s32.totalorder %v1175, 5000
        %vm1432 = vcmp.lt.s32.totalorder %v1176, 5000
        %vm1433 = vcmp.lt.s32.totalorder %v1177, 5000
        %vm1434 = vcmp.lt.s32.totalorder %v1178, 5000
        %vm1435 = vcmp.lt.s32.totalorder %v1179, 5000
        %vm1436 = vcmp.lt.s32.totalorder %v1180, 5000
        %vm1437 = vcmp.lt.s32.totalorder %v1181, 5000
        %vm1438 = vcmp.lt.s32.totalorder %v1182, 5000
        %vm1439 = vcmp.lt.s32.totalorder %v1183, 5000
        %vm1440 = vcmp.lt.s32.totalorder %v1184, 5000
        %vm1441 = vcmp.lt.s32.totalorder %v1185, 5000
        %vm1442 = vcmp.lt.s32.totalorder %v1186, 5000
        %vm1443 = vcmp.lt.s32.totalorder %v1187, 5000
        %vm1444 = vcmp.lt.s32.totalorder %v1188, 5000
        %vm1445 = vcmp.lt.s32.totalorder %v1189, 5000
        %vm1446 = vcmp.lt.s32.totalorder %v1190, 5000
        %vm1447 = vcmp.lt.s32.totalorder %v1191, 5000
        %vm1448 = vcmp.lt.s32.totalorder %v1192, 5000
        %vm1449 = vcmp.lt.s32.totalorder %v1193, 5000
        %vm1450 = vcmp.lt.s32.totalorder %v1194, 5000
        %vm1451 = vcmp.lt.s32.totalorder %v1195, 5000
        %vm1452 = vcmp.lt.s32.totalorder %v1196, 5000
        %vm1453 = vcmp.lt.s32.totalorder %v1197, 5000
        %vm1454 = vcmp.lt.s32.totalorder %v1198, 5000
        %vm1455 = vcmp.lt.s32.totalorder %v1199, 5000
        %vm1456 = vcmp.lt.s32.totalorder %v1200, 5000
        %vm1457 = vcmp.lt.s32.totalorder %v1201, 5000
        %vm1458 = vcmp.lt.s32.totalorder %v1202, 5000
        %vm1459 = vcmp.lt.s32.totalorder %v1203, 5000
        %vm1460 = vcmp.lt.s32.totalorder %v1204, 5000
        %vm1461 = vcmp.lt.s32.totalorder %v1205, 5000
        %vm1462 = vcmp.lt.s32.totalorder %v1206, 5000
        %vm1463 = vcmp.lt.s32.totalorder %v1207, 5000
        %vm1464 = vcmp.lt.s32.totalorder %v1208, 5000
        %vm1465 = vcmp.lt.s32.totalorder %v1209, 5000
        %vm1466 = vcmp.lt.s32.totalorder %v1210, 5000
        %vm1467 = vcmp.lt.s32.totalorder %v1211, 5000
        %vm1468 = vcmp.lt.s32.totalorder %v1212, 5000
        %vm1469 = vcmp.lt.s32.totalorder %v1213, 5000
        %vm1470 = vcmp.lt.s32.totalorder %v1214, 5000
        %vm1471 = vcmp.lt.s32.totalorder %v1215, 5000
        %vm1472 = vcmp.lt.s32.totalorder %v1216, 5000
        %vm1473 = vcmp.lt.s32.totalorder %v1217, 5000
        %vm1474 = vcmp.lt.s32.totalorder %v1218, 5000
        %vm1475 = vcmp.lt.s32.totalorder %v1219, 5000
        %vm1476 = vcmp.lt.s32.totalorder %v1220, 5000
        %vm1477 = vcmp.lt.s32.totalorder %v1221, 5000
        %vm1478 = vcmp.lt.s32.totalorder %v1222, 5000
        %vm1479 = vcmp.lt.s32.totalorder %v1223, 5000
        %vm1480 = vcmp.lt.s32.totalorder %v1224, 5000
        %vm1481 = vcmp.lt.s32.totalorder %v1225, 5000
        %vm1482 = vcmp.lt.s32.totalorder %v1226, 5000
        %vm1483 = vcmp.lt.s32.totalorder %v1227, 5000
        %vm1484 = vcmp.lt.s32.totalorder %v1228, 5000
        %vm1485 = vcmp.lt.s32.totalorder %v1229, 5000
        %vm1486 = vcmp.lt.s32.totalorder %v1230, 5000
        %vm1487 = vcmp.lt.s32.totalorder %v1231, 5000
        %vm1488 = vcmp.lt.s32.totalorder %v1232, 5000
        %vm1489 = vcmp.lt.s32.totalorder %v1233, 5000
        %vm1490 = vcmp.lt.s32.totalorder %v1234, 5000
        %vm1491 = vcmp.lt.s32.totalorder %v1235, 5000
        %vm1492 = vcmp.lt.s32.totalorder %v1236, 5000
        %vm1493 = vcmp.lt.s32.totalorder %v1237, 5000
        %vm1494 = vcmp.lt.s32.totalorder %v1238, 5000
        %vm1495 = vcmp.lt.s32.totalorder %v1239, 5000
        %vm1496 = vcmp.lt.s32.totalorder %v1240, 5000
        %vm1497 = vcmp.lt.s32.totalorder %v1241, 5000
        %vm1498 = vcmp.lt.s32.totalorder %v1242, 5000
        %vm1499 = vcmp.lt.s32.totalorder %v1243, 5000
        %vm1500 = vcmp.lt.s32.totalorder %v1244, 5000
        %vm1501 = vcmp.lt.s32.totalorder %v1245, 5000
        %vm1502 = vcmp.lt.s32.totalorder %v1246, 5000
        %vm1503 = vcmp.lt.s32.totalorder %v1247, 5000
        %vm1504 = vcmp.lt.s32.totalorder %v1248, 5000
        %vm1505 = vcmp.lt.s32.totalorder %v1249, 5000
        %vm1506 = vcmp.lt.s32.totalorder %v1250, 5000
        %vm1507 = vcmp.lt.s32.totalorder %v1251, 5000
        %vm1508 = vcmp.lt.s32.totalorder %v1252, 5000
        %vm1509 = vcmp.lt.s32.totalorder %v1253, 5000
        %vm1510 = vcmp.lt.s32.totalorder %v1254, 5000
        %vm1511 = vcmp.lt.s32.totalorder %v1255, 5000
        %vm1512 = vcmp.lt.s32.totalorder %v1256, 5000
        %vm1513 = vcmp.lt.s32.totalorder %v1257, 5000
        %vm1514 = vcmp.lt.s32.totalorder %v1258, 5000
        %vm1515 = vcmp.lt.s32.totalorder %v1259, 5000
        %vm1516 = vcmp.lt.s32.totalorder %v1260, 5000
        %vm1517 = vcmp.lt.s32.totalorder %v1261, 5000
        %vm1518 = vcmp.lt.s32.totalorder %v1262, 5000
        %vm1519 = vcmp.lt.s32.totalorder %v1263, 5000
        %vm1520 = vcmp.lt.s32.totalorder %v1264, 5000
        %vm1521 = vcmp.lt.s32.totalorder %v1265, 5000
        %vm1522 = vcmp.lt.s32.totalorder %v1266, 5000
        %vm1523 = vcmp.lt.s32.totalorder %v1267, 5000
        %vm1524 = vcmp.lt.s32.totalorder %v1268, 5000
        %vm1525 = vcmp.lt.s32.totalorder %v1269, 5000
        %vm1526 = vcmp.lt.s32.totalorder %v1270, 5000
        %vm1527 = vcmp.lt.s32.totalorder %v1271, 5000
        %vm1528 = vcmp.lt.s32.totalorder %v1272, 5000
        %vm1529 = vcmp.lt.s32.totalorder %v1273, 5000
        %vm1530 = vcmp.lt.s32.totalorder %v1274, 5000
        %vm1531 = vcmp.lt.s32.totalorder %v1275, 5000
        %vm1532 = vcmp.lt.s32.totalorder %v1276, 5000
        %vm1533 = vcmp.lt.s32.totalorder %v1277, 5000
        %vm1534 = vcmp.lt.s32.totalorder %v1278, 5000
        %vm1535 = vcmp.lt.s32.totalorder %v1279, 5000
        %vm1536 = vcmp.lt.s32.totalorder %v1280, 5000
        %vm1537 = vcmp.lt.s32.totalorder %v1281, 5000
        %vm1538 = vcmp.lt.s32.totalorder %v1282, 5000
        %vm1539 = vcmp.lt.s32.totalorder %v1283, 5000
        %vm1540 = vcmp.lt.s32.totalorder %v1284, 5000
        %vm1541 = vcmp.lt.s32.totalorder %v1285, 5000
        %v1542 = vsel %vm1286, 1, 0
        %v1543 = vsel %vm1287, 1, 0
        %v1544 = vsel %vm1288, 1, 0
        %v1545 = vsel %vm1289, 1, 0
        %v1546 = vsel %vm1290, 1, 0
        %v1547 = vsel %vm1291, 1, 0
        %v1548 = vsel %vm1292, 1, 0
        %v1549 = vsel %vm1293, 1, 0
        %v1550 = vsel %vm1294, 1, 0
        %v1551 = vsel %vm1295, 1, 0
        %v1552 = vsel %vm1296, 1, 0
        %v1553 = vsel %vm1297, 1, 0
        %v1554 = vsel %vm1298, 1, 0
        %v1555 = vsel %vm1299, 1, 0
        %v1556 = vsel %vm1300, 1, 0
        %v1557 = vsel %vm1301, 1, 0
        %v1558 = vsel %vm1302, 1, 0
        %v1559 = vsel %vm1303, 1, 0
        %v1560 = vsel %vm1304, 1, 0
        %v1561 = vsel %vm1305, 1, 0
        %v1562 = vsel %vm1306, 1, 0
        %v1563 = vsel %vm1307, 1, 0
        %v1564 = vsel %vm1308, 1, 0
        %v1565 = vsel %vm1309, 1, 0
        %v1566 = vsel %vm1310, 1, 0
        %v1567 = vsel %vm1311, 1, 0
        %v1568 = vsel %vm1312, 1, 0
        %v1569 = vsel %vm1313, 1, 0
        %v1570 = vsel %vm1314, 1, 0
        %v1571 = vsel %vm1315, 1, 0
        %v1572 = vsel %vm1316, 1, 0
        %v1573 = vsel %vm1317, 1, 0
        %v1574 = vsel %vm1318, 1, 0
        %v1575 = vsel %vm1319, 1, 0
        %v1576 = vsel %vm1320, 1, 0
        %v1577 = vsel %vm1321, 1, 0
        %v1578 = vsel %vm1322, 1, 0
        %v1579 = vsel %vm1323, 1, 0
        %v1580 = vsel %vm1324, 1, 0
        %v1581 = vsel %vm1325, 1, 0
        %v1582 = vsel %vm1326, 1, 0
        %v1583 = vsel %vm1327, 1, 0
        %v1584 = vsel %vm1328, 1, 0
        %v1585 = vsel %vm1329, 1, 0
        %v1586 = vsel %vm1330, 1, 0
        %v1587 = vsel %vm1331, 1, 0
        %v1588 = vsel %vm1332, 1, 0
        %v1589 = vsel %vm1333, 1, 0
        %v1590 = vsel %vm1334, 1, 0
        %v1591 = vsel %vm1335, 1, 0
        %v1592 = vsel %vm1336, 1, 0
        %v1593 = vsel %vm1337, 1, 0
        %v1594 = vsel %vm1338, 1, 0
        %v1595 = vsel %vm1339, 1, 0
        %v1596 = vsel %vm1340, 1, 0
        %v1597 = vsel %vm1341, 1, 0
        %v1598 = vsel %vm1342, 1, 0
        %v1599 = vsel %vm1343, 1, 0
        %v1600 = vsel %vm1344, 1, 0
        %v1601 = vsel %vm1345, 1, 0
        %v1602 = vsel %vm1346, 1, 0
        %v1603 = vsel %vm1347, 1, 0
        %v1604 = vsel %vm1348, 1, 0
        %v1605 = vsel %vm1349, 1, 0
        %v1606 = vsel %vm1350, 1, 0
        %v1607 = vsel %vm1351, 1, 0
        %v1608 = vsel %vm1352, 1, 0
        %v1609 = vsel %vm1353, 1, 0
        %v1610 = vsel %vm1354, 1, 0
        %v1611 = vsel %vm1355, 1, 0
        %v1612 = vsel %vm1356, 1, 0
        %v1613 = vsel %vm1357, 1, 0
        %v1614 = vsel %vm1358, 1, 0
        %v1615 = vsel %vm1359, 1, 0
        %v1616 = vsel %vm1360, 1, 0
        %v1617 = vsel %vm1361, 1, 0
        %v1618 = vsel %vm1362, 1, 0
        %v1619 = vsel %vm1363, 1, 0
        %v1620 = vsel %vm1364, 1, 0
        %v1621 = vsel %vm1365, 1, 0
        %v1622 = vsel %vm1366, 1, 0
        %v1623 = vsel %vm1367, 1, 0
        %v1624 = vsel %vm1368, 1, 0
        %v1625 = vsel %vm1369, 1, 0
        %v1626 = vsel %vm1370, 1, 0
        %v1627 = vsel %vm1371, 1, 0
        %v1628 = vsel %vm1372, 1, 0
        %v1629 = vsel %vm1373, 1, 0
        %v1630 = vsel %vm1374, 1, 0
        %v1631 = vsel %vm1375, 1, 0
        %v1632 = vsel %vm1376, 1, 0
        %v1633 = vsel %vm1377, 1, 0
        %v1634 = vsel %vm1378, 1, 0
        %v1635 = vsel %vm1379, 1, 0
        %v1636 = vsel %vm1380, 1, 0
        %v1637 = vsel %vm1381, 1, 0
        %v1638 = vsel %vm1382, 1, 0
        %v1639 = vsel %vm1383, 1, 0
        %v1640 = vsel %vm1384, 1, 0
        %v1641 = vsel %vm1385, 1, 0
        %v1642 = vsel %vm1386, 1, 0
        %v1643 = vsel %vm1387, 1, 0
        %v1644 = vsel %vm1388, 1, 0
        %v1645 = vsel %vm1389, 1, 0
        %v1646 = vsel %vm1390, 1, 0
        %v1647 = vsel %vm1391, 1, 0
        %v1648 = vsel %vm1392, 1, 0
        %v1649 = vsel %vm1393, 1, 0
        %v1650 = vsel %vm1394, 1, 0
        %v1651 = vsel %vm1395, 1, 0
        %v1652 = vsel %vm1396, 1, 0
        %v1653 = vsel %vm1397, 1, 0
        %v1654 = vsel %vm1398, 1, 0
        %v1655 = vsel %vm1399, 1, 0
        %v1656 = vsel %vm1400, 1, 0
        %v1657 = vsel %vm1401, 1, 0
        %v1658 = vsel %vm1402, 1, 0
        %v1659 = vsel %vm1403, 1, 0
        %v1660 = vsel %vm1404, 1, 0
        %v1661 = vsel %vm1405, 1, 0
        %v1662 = vsel %vm1406, 1, 0
        %v1663 = vsel %vm1407, 1, 0
        %v1664 = vsel %vm1408, 1, 0
        %v1665 = vsel %vm1409, 1, 0
        %v1666 = vsel %vm1410, 1, 0
        %v1667 = vsel %vm1411, 1, 0
        %v1668 = vsel %vm1412, 1, 0
        %v1669 = vsel %vm1413, 1, 0
        %v1670 = vsel %vm1414, 1, 0
        %v1671 = vsel %vm1415, 1, 0
        %v1672 = vsel %vm1416, 1, 0
        %v1673 = vsel %vm1417, 1, 0
        %v1674 = vsel %vm1418, 1, 0
        %v1675 = vsel %vm1419, 1, 0
        %v1676 = vsel %vm1420, 1, 0
        %v1677 = vsel %vm1421, 1, 0
        %v1678 = vsel %vm1422, 1, 0
        %v1679 = vsel %vm1423, 1, 0
        %v1680 = vsel %vm1424, 1, 0
        %v1681 = vsel %vm1425, 1, 0
        %v1682 = vsel %vm1426, 1, 0
        %v1683 = vsel %vm1427, 1, 0
        %v1684 = vsel %vm1428, 1, 0
        %v1685 = vsel %vm1429, 1, 0
        %v1686 = vsel %vm1430, 1, 0
        %v1687 = vsel %vm1431, 1, 0
        %v1688 = vsel %vm1432, 1, 0
        %v1689 = vsel %vm1433, 1, 0
        %v1690 = vsel %vm1434, 1, 0
        %v1691 = vsel %vm1435, 1, 0
        %v1692 = vsel %vm1436, 1, 0
        %v1693 = vsel %vm1437, 1, 0
        %v1694 = vsel %vm1438, 1, 0
        %v1695 = vsel %vm1439, 1, 0
        %v1696 = vsel %vm1440, 1, 0
        %v1697 = vsel %vm1441, 1, 0
        %v1698 = vsel %vm1442, 1, 0
        %v1699 = vsel %vm1443, 1, 0
        %v1700 = vsel %vm1444, 1, 0
        %v1701 = vsel %vm1445, 1, 0
        %v1702 = vsel %vm1446, 1, 0
        %v1703 = vsel %vm1447, 1, 0
        %v1704 = vsel %vm1448, 1, 0
        %v1705 = vsel %vm1449, 1, 0
        %v1706 = vsel %vm1450, 1, 0
        %v1707 = vsel %vm1451, 1, 0
        %v1708 = vsel %vm1452, 1, 0
        %v1709 = vsel %vm1453, 1, 0
        %v1710 = vsel %vm1454, 1, 0
        %v1711 = vsel %vm1455, 1, 0
        %v1712 = vsel %vm1456, 1, 0
        %v1713 = vsel %vm1457, 1, 0
        %v1714 = vsel %vm1458, 1, 0
        %v1715 = vsel %vm1459, 1, 0
        %v1716 = vsel %vm1460, 1, 0
        %v1717 = vsel %vm1461, 1, 0
        %v1718 = vsel %vm1462, 1, 0
        %v1719 = vsel %vm1463, 1, 0
        %v1720 = vsel %vm1464, 1, 0
        %v1721 = vsel %vm1465, 1, 0
        %v1722 = vsel %vm1466, 1, 0
        %v1723 = vsel %vm1467, 1, 0
        %v1724 = vsel %vm1468, 1, 0
        %v1725 = vsel %vm1469, 1, 0
        %v1726 = vsel %vm1470, 1, 0
        %v1727 = vsel %vm1471, 1, 0
        %v1728 = vsel %vm1472, 1, 0
        %v1729 = vsel %vm1473, 1, 0
        %v1730 = vsel %vm1474, 1, 0
        %v1731 = vsel %vm1475, 1, 0
        %v1732 = vsel %vm1476, 1, 0
        %v1733 = vsel %vm1477, 1, 0
        %v1734 = vsel %vm1478, 1, 0
        %v1735 = vsel %vm1479, 1, 0
        %v1736 = vsel %vm1480, 1, 0
        %v1737 = vsel %vm1481, 1, 0
        %v1738 = vsel %vm1482, 1, 0
        %v1739 = vsel %vm1483, 1, 0
        %v1740 = vsel %vm1484, 1, 0
        %v1741 = vsel %vm1485, 1, 0
        %v1742 = vsel %vm1486, 1, 0
        %v1743 = vsel %vm1487, 1, 0
        %v1744 = vsel %vm1488, 1, 0
        %v1745 = vsel %vm1489, 1, 0
        %v1746 = vsel %vm1490, 1, 0
        %v1747 = vsel %vm1491, 1, 0
        %v1748 = vsel %vm1492, 1, 0
        %v1749 = vsel %vm1493, 1, 0
        %v1750 = vsel %vm1494, 1, 0
        %v1751 = vsel %vm1495, 1, 0
        %v1752 = vsel %vm1496, 1, 0
        %v1753 = vsel %vm1497, 1, 0
        %v1754 = vsel %vm1498, 1, 0
        %v1755 = vsel %vm1499, 1, 0
        %v1756 = vsel %vm1500, 1, 0
        %v1757 = vsel %vm1501, 1, 0
        %v1758 = vsel %vm1502, 1, 0
        %v1759 = vsel %vm1503, 1, 0
        %v1760 = vsel %vm1504, 1, 0
        %v1761 = vsel %vm1505, 1, 0
        %v1762 = vsel %vm1506, 1, 0
        %v1763 = vsel %vm1507, 1, 0
        %v1764 = vsel %vm1508, 1, 0
        %v1765 = vsel %vm1509, 1, 0
        %v1766 = vsel %vm1510, 1, 0
        %v1767 = vsel %vm1511, 1, 0
        %v1768 = vsel %vm1512, 1, 0
        %v1769 = vsel %vm1513, 1, 0
        %v1770 = vsel %vm1514, 1, 0
        %v1771 = vsel %vm1515, 1, 0
        %v1772 = vsel %vm1516, 1, 0
        %v1773 = vsel %vm1517, 1, 0
        %v1774 = vsel %vm1518, 1, 0
        %v1775 = vsel %vm1519, 1, 0
        %v1776 = vsel %vm1520, 1, 0
        %v1777 = vsel %vm1521, 1, 0
        %v1778 = vsel %vm1522, 1, 0
        %v1779 = vsel %vm1523, 1, 0
        %v1780 = vsel %vm1524, 1, 0
        %v1781 = vsel %vm1525, 1, 0
        %v1782 = vsel %vm1526, 1, 0
        %v1783 = vsel %vm1527, 1, 0
        %v1784 = vsel %vm1528, 1, 0
        %v1785 = vsel %vm1529, 1, 0
        %v1786 = vsel %vm1530, 1, 0
        %v1787 = vsel %vm1531, 1, 0
        %v1788 = vsel %vm1532, 1, 0
        %v1789 = vsel %vm1533, 1, 0
        %v1790 = vsel %vm1534, 1, 0
        %v1791 = vsel %vm1535, 1, 0
        %v1792 = vsel %vm1536, 1, 0
        %v1793 = vsel %vm1537, 1, 0
        %v1794 = vsel %vm1538, 1, 0
        %v1795 = vsel %vm1539, 1, 0
        %v1796 = vsel %vm1540, 1, 0
        %v1797 = vsel %vm1541, 1, 0
        %vm1798 = vcmp.eq.s32.totalorder %v1542, 1
        %vm1799 = vcmp.eq.s32.totalorder %v1543, 1
        %vm1800 = vcmp.eq.s32.totalorder %v1544, 1
        %vm1801 = vcmp.eq.s32.totalorder %v1545, 1
        %vm1802 = vcmp.eq.s32.totalorder %v1546, 1
        %vm1803 = vcmp.eq.s32.totalorder %v1547, 1
        %vm1804 = vcmp.eq.s32.totalorder %v1548, 1
        %vm1805 = vcmp.eq.s32.totalorder %v1549, 1
        %vm1806 = vcmp.eq.s32.totalorder %v1550, 1
        %vm1807 = vcmp.eq.s32.totalorder %v1551, 1
        %vm1808 = vcmp.eq.s32.totalorder %v1552, 1
        %vm1809 = vcmp.eq.s32.totalorder %v1553, 1
        %vm1810 = vcmp.eq.s32.totalorder %v1554, 1
        %vm1811 = vcmp.eq.s32.totalorder %v1555, 1
        %vm1812 = vcmp.eq.s32.totalorder %v1556, 1
        %vm1813 = vcmp.eq.s32.totalorder %v1557, 1
        %vm1814 = vcmp.eq.s32.totalorder %v1558, 1
        %vm1815 = vcmp.eq.s32.totalorder %v1559, 1
        %vm1816 = vcmp.eq.s32.totalorder %v1560, 1
        %vm1817 = vcmp.eq.s32.totalorder %v1561, 1
        %vm1818 = vcmp.eq.s32.totalorder %v1562, 1
        %vm1819 = vcmp.eq.s32.totalorder %v1563, 1
        %vm1820 = vcmp.eq.s32.totalorder %v1564, 1
        %vm1821 = vcmp.eq.s32.totalorder %v1565, 1
        %vm1822 = vcmp.eq.s32.totalorder %v1566, 1
        %vm1823 = vcmp.eq.s32.totalorder %v1567, 1
        %vm1824 = vcmp.eq.s32.totalorder %v1568, 1
        %vm1825 = vcmp.eq.s32.totalorder %v1569, 1
        %vm1826 = vcmp.eq.s32.totalorder %v1570, 1
        %vm1827 = vcmp.eq.s32.totalorder %v1571, 1
        %vm1828 = vcmp.eq.s32.totalorder %v1572, 1
        %vm1829 = vcmp.eq.s32.totalorder %v1573, 1
        %vm1830 = vcmp.eq.s32.totalorder %v1574, 1
        %vm1831 = vcmp.eq.s32.totalorder %v1575, 1
        %vm1832 = vcmp.eq.s32.totalorder %v1576, 1
        %vm1833 = vcmp.eq.s32.totalorder %v1577, 1
        %vm1834 = vcmp.eq.s32.totalorder %v1578, 1
        %vm1835 = vcmp.eq.s32.totalorder %v1579, 1
        %vm1836 = vcmp.eq.s32.totalorder %v1580, 1
        %vm1837 = vcmp.eq.s32.totalorder %v1581, 1
        %vm1838 = vcmp.eq.s32.totalorder %v1582, 1
        %vm1839 = vcmp.eq.s32.totalorder %v1583, 1
        %vm1840 = vcmp.eq.s32.totalorder %v1584, 1
        %vm1841 = vcmp.eq.s32.totalorder %v1585, 1
        %vm1842 = vcmp.eq.s32.totalorder %v1586, 1
        %vm1843 = vcmp.eq.s32.totalorder %v1587, 1
        %vm1844 = vcmp.eq.s32.totalorder %v1588, 1
        %vm1845 = vcmp.eq.s32.totalorder %v1589, 1
        %vm1846 = vcmp.eq.s32.totalorder %v1590, 1
        %vm1847 = vcmp.eq.s32.totalorder %v1591, 1
        %vm1848 = vcmp.eq.s32.totalorder %v1592, 1
        %vm1849 = vcmp.eq.s32.totalorder %v1593, 1
        %vm1850 = vcmp.eq.s32.totalorder %v1594, 1
        %vm1851 = vcmp.eq.s32.totalorder %v1595, 1
        %vm1852 = vcmp.eq.s32.totalorder %v1596, 1
        %vm1853 = vcmp.eq.s32.totalorder %v1597, 1
        %vm1854 = vcmp.eq.s32.totalorder %v1598, 1
        %vm1855 = vcmp.eq.s32.totalorder %v1599, 1
        %vm1856 = vcmp.eq.s32.totalorder %v1600, 1
        %vm1857 = vcmp.eq.s32.totalorder %v1601, 1
        %vm1858 = vcmp.eq.s32.totalorder %v1602, 1
        %vm1859 = vcmp.eq.s32.totalorder %v1603, 1
        %vm1860 = vcmp.eq.s32.totalorder %v1604, 1
        %vm1861 = vcmp.eq.s32.totalorder %v1605, 1
        %vm1862 = vcmp.eq.s32.totalorder %v1606, 1
        %vm1863 = vcmp.eq.s32.totalorder %v1607, 1
        %vm1864 = vcmp.eq.s32.totalorder %v1608, 1
        %vm1865 = vcmp.eq.s32.totalorder %v1609, 1
        %vm1866 = vcmp.eq.s32.totalorder %v1610, 1
        %vm1867 = vcmp.eq.s32.totalorder %v1611, 1
        %vm1868 = vcmp.eq.s32.totalorder %v1612, 1
        %vm1869 = vcmp.eq.s32.totalorder %v1613, 1
        %vm1870 = vcmp.eq.s32.totalorder %v1614, 1
        %vm1871 = vcmp.eq.s32.totalorder %v1615, 1
        %vm1872 = vcmp.eq.s32.totalorder %v1616, 1
        %vm1873 = vcmp.eq.s32.totalorder %v1617, 1
        %vm1874 = vcmp.eq.s32.totalorder %v1618, 1
        %vm1875 = vcmp.eq.s32.totalorder %v1619, 1
        %vm1876 = vcmp.eq.s32.totalorder %v1620, 1
        %vm1877 = vcmp.eq.s32.totalorder %v1621, 1
        %vm1878 = vcmp.eq.s32.totalorder %v1622, 1
        %vm1879 = vcmp.eq.s32.totalorder %v1623, 1
        %vm1880 = vcmp.eq.s32.totalorder %v1624, 1
        %vm1881 = vcmp.eq.s32.totalorder %v1625, 1
        %vm1882 = vcmp.eq.s32.totalorder %v1626, 1
        %vm1883 = vcmp.eq.s32.totalorder %v1627, 1
        %vm1884 = vcmp.eq.s32.totalorder %v1628, 1
        %vm1885 = vcmp.eq.s32.totalorder %v1629, 1
        %vm1886 = vcmp.eq.s32.totalorder %v1630, 1
        %vm1887 = vcmp.eq.s32.totalorder %v1631, 1
        %vm1888 = vcmp.eq.s32.totalorder %v1632, 1
        %vm1889 = vcmp.eq.s32.totalorder %v1633, 1
        %vm1890 = vcmp.eq.s32.totalorder %v1634, 1
        %vm1891 = vcmp.eq.s32.totalorder %v1635, 1
        %vm1892 = vcmp.eq.s32.totalorder %v1636, 1
        %vm1893 = vcmp.eq.s32.totalorder %v1637, 1
        %vm1894 = vcmp.eq.s32.totalorder %v1638, 1
        %vm1895 = vcmp.eq.s32.totalorder %v1639, 1
        %vm1896 = vcmp.eq.s32.totalorder %v1640, 1
        %vm1897 = vcmp.eq.s32.totalorder %v1641, 1
        %vm1898 = vcmp.eq.s32.totalorder %v1642, 1
        %vm1899 = vcmp.eq.s32.totalorder %v1643, 1
        %vm1900 = vcmp.eq.s32.totalorder %v1644, 1
        %vm1901 = vcmp.eq.s32.totalorder %v1645, 1
        %vm1902 = vcmp.eq.s32.totalorder %v1646, 1
        %vm1903 = vcmp.eq.s32.totalorder %v1647, 1
        %vm1904 = vcmp.eq.s32.totalorder %v1648, 1
        %vm1905 = vcmp.eq.s32.totalorder %v1649, 1
        %vm1906 = vcmp.eq.s32.totalorder %v1650, 1
        %vm1907 = vcmp.eq.s32.totalorder %v1651, 1
        %vm1908 = vcmp.eq.s32.totalorder %v1652, 1
        %vm1909 = vcmp.eq.s32.totalorder %v1653, 1
        %vm1910 = vcmp.eq.s32.totalorder %v1654, 1
        %vm1911 = vcmp.eq.s32.totalorder %v1655, 1
        %vm1912 = vcmp.eq.s32.totalorder %v1656, 1
        %vm1913 = vcmp.eq.s32.totalorder %v1657, 1
        %vm1914 = vcmp.eq.s32.totalorder %v1658, 1
        %vm1915 = vcmp.eq.s32.totalorder %v1659, 1
        %vm1916 = vcmp.eq.s32.totalorder %v1660, 1
        %vm1917 = vcmp.eq.s32.totalorder %v1661, 1
        %vm1918 = vcmp.eq.s32.totalorder %v1662, 1
        %vm1919 = vcmp.eq.s32.totalorder %v1663, 1
        %vm1920 = vcmp.eq.s32.totalorder %v1664, 1
        %vm1921 = vcmp.eq.s32.totalorder %v1665, 1
        %vm1922 = vcmp.eq.s32.totalorder %v1666, 1
        %vm1923 = vcmp.eq.s32.totalorder %v1667, 1
        %vm1924 = vcmp.eq.s32.totalorder %v1668, 1
        %vm1925 = vcmp.eq.s32.totalorder %v1669, 1
        %vm1926 = vcmp.eq.s32.totalorder %v1670, 1
        %vm1927 = vcmp.eq.s32.totalorder %v1671, 1
        %vm1928 = vcmp.eq.s32.totalorder %v1672, 1
        %vm1929 = vcmp.eq.s32.totalorder %v1673, 1
        %vm1930 = vcmp.eq.s32.totalorder %v1674, 1
        %vm1931 = vcmp.eq.s32.totalorder %v1675, 1
        %vm1932 = vcmp.eq.s32.totalorder %v1676, 1
        %vm1933 = vcmp.eq.s32.totalorder %v1677, 1
        %vm1934 = vcmp.eq.s32.totalorder %v1678, 1
        %vm1935 = vcmp.eq.s32.totalorder %v1679, 1
        %vm1936 = vcmp.eq.s32.totalorder %v1680, 1
        %vm1937 = vcmp.eq.s32.totalorder %v1681, 1
        %vm1938 = vcmp.eq.s32.totalorder %v1682, 1
        %vm1939 = vcmp.eq.s32.totalorder %v1683, 1
        %vm1940 = vcmp.eq.s32.totalorder %v1684, 1
        %vm1941 = vcmp.eq.s32.totalorder %v1685, 1
        %vm1942 = vcmp.eq.s32.totalorder %v1686, 1
        %vm1943 = vcmp.eq.s32.totalorder %v1687, 1
        %vm1944 = vcmp.eq.s32.totalorder %v1688, 1
        %vm1945 = vcmp.eq.s32.totalorder %v1689, 1
        %vm1946 = vcmp.eq.s32.totalorder %v1690, 1
        %vm1947 = vcmp.eq.s32.totalorder %v1691, 1
        %vm1948 = vcmp.eq.s32.totalorder %v1692, 1
        %vm1949 = vcmp.eq.s32.totalorder %v1693, 1
        %vm1950 = vcmp.eq.s32.totalorder %v1694, 1
        %vm1951 = vcmp.eq.s32.totalorder %v1695, 1
        %vm1952 = vcmp.eq.s32.totalorder %v1696, 1
        %vm1953 = vcmp.eq.s32.totalorder %v1697, 1
        %vm1954 = vcmp.eq.s32.totalorder %v1698, 1
        %vm1955 = vcmp.eq.s32.totalorder %v1699, 1
        %vm1956 = vcmp.eq.s32.totalorder %v1700, 1
        %vm1957 = vcmp.eq.s32.totalorder %v1701, 1
        %vm1958 = vcmp.eq.s32.totalorder %v1702, 1
        %vm1959 = vcmp.eq.s32.totalorder %v1703, 1
        %vm1960 = vcmp.eq.s32.totalorder %v1704, 1
        %vm1961 = vcmp.eq.s32.totalorder %v1705, 1
        %vm1962 = vcmp.eq.s32.totalorder %v1706, 1
        %vm1963 = vcmp.eq.s32.totalorder %v1707, 1
        %vm1964 = vcmp.eq.s32.totalorder %v1708, 1
        %vm1965 = vcmp.eq.s32.totalorder %v1709, 1
        %vm1966 = vcmp.eq.s32.totalorder %v1710, 1
        %vm1967 = vcmp.eq.s32.totalorder %v1711, 1
        %vm1968 = vcmp.eq.s32.totalorder %v1712, 1
        %vm1969 = vcmp.eq.s32.totalorder %v1713, 1
        %vm1970 = vcmp.eq.s32.totalorder %v1714, 1
        %vm1971 = vcmp.eq.s32.totalorder %v1715, 1
        %vm1972 = vcmp.eq.s32.totalorder %v1716, 1
        %vm1973 = vcmp.eq.s32.totalorder %v1717, 1
        %vm1974 = vcmp.eq.s32.totalorder %v1718, 1
        %vm1975 = vcmp.eq.s32.totalorder %v1719, 1
        %vm1976 = vcmp.eq.s32.totalorder %v1720, 1
        %vm1977 = vcmp.eq.s32.totalorder %v1721, 1
        %vm1978 = vcmp.eq.s32.totalorder %v1722, 1
        %vm1979 = vcmp.eq.s32.totalorder %v1723, 1
        %vm1980 = vcmp.eq.s32.totalorder %v1724, 1
        %vm1981 = vcmp.eq.s32.totalorder %v1725, 1
        %vm1982 = vcmp.eq.s32.totalorder %v1726, 1
        %vm1983 = vcmp.eq.s32.totalorder %v1727, 1
        %vm1984 = vcmp.eq.s32.totalorder %v1728, 1
        %vm1985 = vcmp.eq.s32.totalorder %v1729, 1
        %vm1986 = vcmp.eq.s32.totalorder %v1730, 1
        %vm1987 = vcmp.eq.s32.totalorder %v1731, 1
        %vm1988 = vcmp.eq.s32.totalorder %v1732, 1
        %vm1989 = vcmp.eq.s32.totalorder %v1733, 1
        %vm1990 = vcmp.eq.s32.totalorder %v1734, 1
        %vm1991 = vcmp.eq.s32.totalorder %v1735, 1
        %vm1992 = vcmp.eq.s32.totalorder %v1736, 1
        %vm1993 = vcmp.eq.s32.totalorder %v1737, 1
        %vm1994 = vcmp.eq.s32.totalorder %v1738, 1
        %vm1995 = vcmp.eq.s32.totalorder %v1739, 1
        %vm1996 = vcmp.eq.s32.totalorder %v1740, 1
        %vm1997 = vcmp.eq.s32.totalorder %v1741, 1
        %vm1998 = vcmp.eq.s32.totalorder %v1742, 1
        %vm1999 = vcmp.eq.s32.totalorder %v1743, 1
        %vm2000 = vcmp.eq.s32.totalorder %v1744, 1
        %vm2001 = vcmp.eq.s32.totalorder %v1745, 1
        %vm2002 = vcmp.eq.s32.totalorder %v1746, 1
        %vm2003 = vcmp.eq.s32.totalorder %v1747, 1
        %vm2004 = vcmp.eq.s32.totalorder %v1748, 1
        %vm2005 = vcmp.eq.s32.totalorder %v1749, 1
        %vm2006 = vcmp.eq.s32.totalorder %v1750, 1
        %vm2007 = vcmp.eq.s32.totalorder %v1751, 1
        %vm2008 = vcmp.eq.s32.totalorder %v1752, 1
        %vm2009 = vcmp.eq.s32.totalorder %v1753, 1
        %vm2010 = vcmp.eq.s32.totalorder %v1754, 1
        %vm2011 = vcmp.eq.s32.totalorder %v1755, 1
        %vm2012 = vcmp.eq.s32.totalorder %v1756, 1
        %vm2013 = vcmp.eq.s32.totalorder %v1757, 1
        %vm2014 = vcmp.eq.s32.totalorder %v1758, 1
        %vm2015 = vcmp.eq.s32.totalorder %v1759, 1
        %vm2016 = vcmp.eq.s32.totalorder %v1760, 1
        %vm2017 = vcmp.eq.s32.totalorder %v1761, 1
        %vm2018 = vcmp.eq.s32.totalorder %v1762, 1
        %vm2019 = vcmp.eq.s32.totalorder %v1763, 1
        %vm2020 = vcmp.eq.s32.totalorder %v1764, 1
        %vm2021 = vcmp.eq.s32.totalorder %v1765, 1
        %vm2022 = vcmp.eq.s32.totalorder %v1766, 1
        %vm2023 = vcmp.eq.s32.totalorder %v1767, 1
        %vm2024 = vcmp.eq.s32.totalorder %v1768, 1
        %vm2025 = vcmp.eq.s32.totalorder %v1769, 1
        %vm2026 = vcmp.eq.s32.totalorder %v1770, 1
        %vm2027 = vcmp.eq.s32.totalorder %v1771, 1
        %vm2028 = vcmp.eq.s32.totalorder %v1772, 1
        %vm2029 = vcmp.eq.s32.totalorder %v1773, 1
        %vm2030 = vcmp.eq.s32.totalorder %v1774, 1
        %vm2031 = vcmp.eq.s32.totalorder %v1775, 1
        %vm2032 = vcmp.eq.s32.totalorder %v1776, 1
        %vm2033 = vcmp.eq.s32.totalorder %v1777, 1
        %vm2034 = vcmp.eq.s32.totalorder %v1778, 1
        %vm2035 = vcmp.eq.s32.totalorder %v1779, 1
        %vm2036 = vcmp.eq.s32.totalorder %v1780, 1
        %vm2037 = vcmp.eq.s32.totalorder %v1781, 1
        %vm2038 = vcmp.eq.s32.totalorder %v1782, 1
        %vm2039 = vcmp.eq.s32.totalorder %v1783, 1
        %vm2040 = vcmp.eq.s32.totalorder %v1784, 1
        %vm2041 = vcmp.eq.s32.totalorder %v1785, 1
        %vm2042 = vcmp.eq.s32.totalorder %v1786, 1
        %vm2043 = vcmp.eq.s32.totalorder %v1787, 1
        %vm2044 = vcmp.eq.s32.totalorder %v1788, 1
        %vm2045 = vcmp.eq.s32.totalorder %v1789, 1
        %vm2046 = vcmp.eq.s32.totalorder %v1790, 1
        %vm2047 = vcmp.eq.s32.totalorder %v1791, 1
        %vm2048 = vcmp.eq.s32.totalorder %v1792, 1
        %vm2049 = vcmp.eq.s32.totalorder %v1793, 1
        %vm2050 = vcmp.eq.s32.totalorder %v1794, 1
        %vm2051 = vcmp.eq.s32.totalorder %v1795, 1
        %vm2052 = vcmp.eq.s32.totalorder %v1796, 1
        %vm2053 = vcmp.eq.s32.totalorder %v1797, 1
        %v2054 = vsel %vm1798, %v519, 0.0
        %v2055 = vsel %vm1799, %v520, 0.0
        %v2056 = vsel %vm1800, %v521, 0.0
        %v2057 = vsel %vm1801, %v522, 0.0
        %v2058 = vsel %vm1802, %v523, 0.0
        %v2059 = vsel %vm1803, %v524, 0.0
        %v2060 = vsel %vm1804, %v525, 0.0
        %v2061 = vsel %vm1805, %v526, 0.0
        %v2062 = vsel %vm1806, %v527, 0.0
        %v2063 = vsel %vm1807, %v528, 0.0
        %v2064 = vsel %vm1808, %v529, 0.0
        %v2065 = vsel %vm1809, %v530, 0.0
        %v2066 = vsel %vm1810, %v531, 0.0
        %v2067 = vsel %vm1811, %v532, 0.0
        %v2068 = vsel %vm1812, %v533, 0.0
        %v2069 = vsel %vm1813, %v534, 0.0
        %v2070 = vsel %vm1814, %v535, 0.0
        %v2071 = vsel %vm1815, %v536, 0.0
        %v2072 = vsel %vm1816, %v537, 0.0
        %v2073 = vsel %vm1817, %v538, 0.0
        %v2074 = vsel %vm1818, %v539, 0.0
        %v2075 = vsel %vm1819, %v540, 0.0
        %v2076 = vsel %vm1820, %v541, 0.0
        %v2077 = vsel %vm1821, %v542, 0.0
        %v2078 = vsel %vm1822, %v543, 0.0
        %v2079 = vsel %vm1823, %v544, 0.0
        %v2080 = vsel %vm1824, %v545, 0.0
        %v2081 = vsel %vm1825, %v546, 0.0
        %v2082 = vsel %vm1826, %v547, 0.0
        %v2083 = vsel %vm1827, %v548, 0.0
        %v2084 = vsel %vm1828, %v549, 0.0
        %v2085 = vsel %vm1829, %v550, 0.0
        %v2086 = vsel %vm1830, %v551, 0.0
        %v2087 = vsel %vm1831, %v552, 0.0
        %v2088 = vsel %vm1832, %v553, 0.0
        %v2089 = vsel %vm1833, %v554, 0.0
        %v2090 = vsel %vm1834, %v555, 0.0
        %v2091 = vsel %vm1835, %v556, 0.0
        %v2092 = vsel %vm1836, %v557, 0.0
        %v2093 = vsel %vm1837, %v558, 0.0
        %v2094 = vsel %vm1838, %v559, 0.0
        %v2095 = vsel %vm1839, %v560, 0.0
        %v2096 = vsel %vm1840, %v561, 0.0
        %v2097 = vsel %vm1841, %v562, 0.0
        %v2098 = vsel %vm1842, %v563, 0.0
        %v2099 = vsel %vm1843, %v564, 0.0
        %v2100 = vsel %vm1844, %v565, 0.0
        %v2101 = vsel %vm1845, %v566, 0.0
        %v2102 = vsel %vm1846, %v567, 0.0
        %v2103 = vsel %vm1847, %v568, 0.0
        %v2104 = vsel %vm1848, %v569, 0.0
        %v2105 = vsel %vm1849, %v570, 0.0
        %v2106 = vsel %vm1850, %v571, 0.0
        %v2107 = vsel %vm1851, %v572, 0.0
        %v2108 = vsel %vm1852, %v573, 0.0
        %v2109 = vsel %vm1853, %v574, 0.0
        %v2110 = vsel %vm1854, %v575, 0.0
        %v2111 = vsel %vm1855, %v576, 0.0
        %v2112 = vsel %vm1856, %v577, 0.0
        %v2113 = vsel %vm1857, %v578, 0.0
        %v2114 = vsel %vm1858, %v579, 0.0
        %v2115 = vsel %vm1859, %v580, 0.0
        %v2116 = vsel %vm1860, %v581, 0.0
        %v2117 = vsel %vm1861, %v582, 0.0
        %v2118 = vsel %vm1862, %v583, 0.0
        %v2119 = vsel %vm1863, %v584, 0.0
        %v2120 = vsel %vm1864, %v585, 0.0
        %v2121 = vsel %vm1865, %v586, 0.0
        %v2122 = vsel %vm1866, %v587, 0.0
        %v2123 = vsel %vm1867, %v588, 0.0
        %v2124 = vsel %vm1868, %v589, 0.0
        %v2125 = vsel %vm1869, %v590, 0.0
        %v2126 = vsel %vm1870, %v591, 0.0
        %v2127 = vsel %vm1871, %v592, 0.0
        %v2128 = vsel %vm1872, %v593, 0.0
        %v2129 = vsel %vm1873, %v594, 0.0
        %v2130 = vsel %vm1874, %v595, 0.0
        %v2131 = vsel %vm1875, %v596, 0.0
        %v2132 = vsel %vm1876, %v597, 0.0
        %v2133 = vsel %vm1877, %v598, 0.0
        %v2134 = vsel %vm1878, %v599, 0.0
        %v2135 = vsel %vm1879, %v600, 0.0
        %v2136 = vsel %vm1880, %v601, 0.0
        %v2137 = vsel %vm1881, %v602, 0.0
        %v2138 = vsel %vm1882, %v603, 0.0
        %v2139 = vsel %vm1883, %v604, 0.0
        %v2140 = vsel %vm1884, %v605, 0.0
        %v2141 = vsel %vm1885, %v606, 0.0
        %v2142 = vsel %vm1886, %v607, 0.0
        %v2143 = vsel %vm1887, %v608, 0.0
        %v2144 = vsel %vm1888, %v609, 0.0
        %v2145 = vsel %vm1889, %v610, 0.0
        %v2146 = vsel %vm1890, %v611, 0.0
        %v2147 = vsel %vm1891, %v612, 0.0
        %v2148 = vsel %vm1892, %v613, 0.0
        %v2149 = vsel %vm1893, %v614, 0.0
        %v2150 = vsel %vm1894, %v615, 0.0
        %v2151 = vsel %vm1895, %v616, 0.0
        %v2152 = vsel %vm1896, %v617, 0.0
        %v2153 = vsel %vm1897, %v618, 0.0
        %v2154 = vsel %vm1898, %v619, 0.0
        %v2155 = vsel %vm1899, %v620, 0.0
        %v2156 = vsel %vm1900, %v621, 0.0
        %v2157 = vsel %vm1901, %v622, 0.0
        %v2158 = vsel %vm1902, %v623, 0.0
        %v2159 = vsel %vm1903, %v624, 0.0
        %v2160 = vsel %vm1904, %v625, 0.0
        %v2161 = vsel %vm1905, %v626, 0.0
        %v2162 = vsel %vm1906, %v627, 0.0
        %v2163 = vsel %vm1907, %v628, 0.0
        %v2164 = vsel %vm1908, %v629, 0.0
        %v2165 = vsel %vm1909, %v630, 0.0
        %v2166 = vsel %vm1910, %v631, 0.0
        %v2167 = vsel %vm1911, %v632, 0.0
        %v2168 = vsel %vm1912, %v633, 0.0
        %v2169 = vsel %vm1913, %v634, 0.0
        %v2170 = vsel %vm1914, %v635, 0.0
        %v2171 = vsel %vm1915, %v636, 0.0
        %v2172 = vsel %vm1916, %v637, 0.0
        %v2173 = vsel %vm1917, %v638, 0.0
        %v2174 = vsel %vm1918, %v639, 0.0
        %v2175 = vsel %vm1919, %v640, 0.0
        %v2176 = vsel %vm1920, %v641, 0.0
        %v2177 = vsel %vm1921, %v642, 0.0
        %v2178 = vsel %vm1922, %v643, 0.0
        %v2179 = vsel %vm1923, %v644, 0.0
        %v2180 = vsel %vm1924, %v645, 0.0
        %v2181 = vsel %vm1925, %v646, 0.0
        %v2182 = vsel %vm1926, %v647, 0.0
        %v2183 = vsel %vm1927, %v648, 0.0
        %v2184 = vsel %vm1928, %v649, 0.0
        %v2185 = vsel %vm1929, %v650, 0.0
        %v2186 = vsel %vm1930, %v651, 0.0
        %v2187 = vsel %vm1931, %v652, 0.0
        %v2188 = vsel %vm1932, %v653, 0.0
        %v2189 = vsel %vm1933, %v654, 0.0
        %v2190 = vsel %vm1934, %v655, 0.0
        %v2191 = vsel %vm1935, %v656, 0.0
        %v2192 = vsel %vm1936, %v657, 0.0
        %v2193 = vsel %vm1937, %v658, 0.0
        %v2194 = vsel %vm1938, %v659, 0.0
        %v2195 = vsel %vm1939, %v660, 0.0
        %v2196 = vsel %vm1940, %v661, 0.0
        %v2197 = vsel %vm1941, %v662, 0.0
        %v2198 = vsel %vm1942, %v663, 0.0
        %v2199 = vsel %vm1943, %v664, 0.0
        %v2200 = vsel %vm1944, %v665, 0.0
        %v2201 = vsel %vm1945, %v666, 0.0
        %v2202 = vsel %vm1946, %v667, 0.0
        %v2203 = vsel %vm1947, %v668, 0.0
        %v2204 = vsel %vm1948, %v669, 0.0
        %v2205 = vsel %vm1949, %v670, 0.0
        %v2206 = vsel %vm1950, %v671, 0.0
        %v2207 = vsel %vm1951, %v672, 0.0
        %v2208 = vsel %vm1952, %v673, 0.0
        %v2209 = vsel %vm1953, %v674, 0.0
        %v2210 = vsel %vm1954, %v675, 0.0
        %v2211 = vsel %vm1955, %v676, 0.0
        %v2212 = vsel %vm1956, %v677, 0.0
        %v2213 = vsel %vm1957, %v678, 0.0
        %v2214 = vsel %vm1958, %v679, 0.0
        %v2215 = vsel %vm1959, %v680, 0.0
        %v2216 = vsel %vm1960, %v681, 0.0
        %v2217 = vsel %vm1961, %v682, 0.0
        %v2218 = vsel %vm1962, %v683, 0.0
        %v2219 = vsel %vm1963, %v684, 0.0
        %v2220 = vsel %vm1964, %v685, 0.0
        %v2221 = vsel %vm1965, %v686, 0.0
        %v2222 = vsel %vm1966, %v687, 0.0
        %v2223 = vsel %vm1967, %v688, 0.0
        %v2224 = vsel %vm1968, %v689, 0.0
        %v2225 = vsel %vm1969, %v690, 0.0
        %v2226 = vsel %vm1970, %v691, 0.0
        %v2227 = vsel %vm1971, %v692, 0.0
        %v2228 = vsel %vm1972, %v693, 0.0
        %v2229 = vsel %vm1973, %v694, 0.0
        %v2230 = vsel %vm1974, %v695, 0.0
        %v2231 = vsel %vm1975, %v696, 0.0
        %v2232 = vsel %vm1976, %v697, 0.0
        %v2233 = vsel %vm1977, %v698, 0.0
        %v2234 = vsel %vm1978, %v699, 0.0
        %v2235 = vsel %vm1979, %v700, 0.0
        %v2236 = vsel %vm1980, %v701, 0.0
        %v2237 = vsel %vm1981, %v702, 0.0
        %v2238 = vsel %vm1982, %v703, 0.0
        %v2239 = vsel %vm1983, %v704, 0.0
        %v2240 = vsel %vm1984, %v705, 0.0
        %v2241 = vsel %vm1985, %v706, 0.0
        %v2242 = vsel %vm1986, %v707, 0.0
        %v2243 = vsel %vm1987, %v708, 0.0
        %v2244 = vsel %vm1988, %v709, 0.0
        %v2245 = vsel %vm1989, %v710, 0.0
        %v2246 = vsel %vm1990, %v711, 0.0
        %v2247 = vsel %vm1991, %v712, 0.0
        %v2248 = vsel %vm1992, %v713, 0.0
        %v2249 = vsel %vm1993, %v714, 0.0
        %v2250 = vsel %vm1994, %v715, 0.0
        %v2251 = vsel %vm1995, %v716, 0.0
        %v2252 = vsel %vm1996, %v717, 0.0
        %v2253 = vsel %vm1997, %v718, 0.0
        %v2254 = vsel %vm1998, %v719, 0.0
        %v2255 = vsel %vm1999, %v720, 0.0
        %v2256 = vsel %vm2000, %v721, 0.0
        %v2257 = vsel %vm2001, %v722, 0.0
        %v2258 = vsel %vm2002, %v723, 0.0
        %v2259 = vsel %vm2003, %v724, 0.0
        %v2260 = vsel %vm2004, %v725, 0.0
        %v2261 = vsel %vm2005, %v726, 0.0
        %v2262 = vsel %vm2006, %v727, 0.0
        %v2263 = vsel %vm2007, %v728, 0.0
        %v2264 = vsel %vm2008, %v729, 0.0
        %v2265 = vsel %vm2009, %v730, 0.0
        %v2266 = vsel %vm2010, %v731, 0.0
        %v2267 = vsel %vm2011, %v732, 0.0
        %v2268 = vsel %vm2012, %v733, 0.0
        %v2269 = vsel %vm2013, %v734, 0.0
        %v2270 = vsel %vm2014, %v735, 0.0
        %v2271 = vsel %vm2015, %v736, 0.0
        %v2272 = vsel %vm2016, %v737, 0.0
        %v2273 = vsel %vm2017, %v738, 0.0
        %v2274 = vsel %vm2018, %v739, 0.0
        %v2275 = vsel %vm2019, %v740, 0.0
        %v2276 = vsel %vm2020, %v741, 0.0
        %v2277 = vsel %vm2021, %v742, 0.0
        %v2278 = vsel %vm2022, %v743, 0.0
        %v2279 = vsel %vm2023, %v744, 0.0
        %v2280 = vsel %vm2024, %v745, 0.0
        %v2281 = vsel %vm2025, %v746, 0.0
        %v2282 = vsel %vm2026, %v747, 0.0
        %v2283 = vsel %vm2027, %v748, 0.0
        %v2284 = vsel %vm2028, %v749, 0.0
        %v2285 = vsel %vm2029, %v750, 0.0
        %v2286 = vsel %vm2030, %v751, 0.0
        %v2287 = vsel %vm2031, %v752, 0.0
        %v2288 = vsel %vm2032, %v753, 0.0
        %v2289 = vsel %vm2033, %v754, 0.0
        %v2290 = vsel %vm2034, %v755, 0.0
        %v2291 = vsel %vm2035, %v756, 0.0
        %v2292 = vsel %vm2036, %v757, 0.0
        %v2293 = vsel %vm2037, %v758, 0.0
        %v2294 = vsel %vm2038, %v759, 0.0
        %v2295 = vsel %vm2039, %v760, 0.0
        %v2296 = vsel %vm2040, %v761, 0.0
        %v2297 = vsel %vm2041, %v762, 0.0
        %v2298 = vsel %vm2042, %v763, 0.0
        %v2299 = vsel %vm2043, %v764, 0.0
        %v2300 = vsel %vm2044, %v765, 0.0
        %v2301 = vsel %vm2045, %v766, 0.0
        %v2302 = vsel %vm2046, %v767, 0.0
        %v2303 = vsel %vm2047, %v768, 0.0
        %v2304 = vsel %vm2048, %v769, 0.0
        %v2305 = vsel %vm2049, %v770, 0.0
        %v2306 = vsel %vm2050, %v771, 0.0
        %v2307 = vsel %vm2051, %v772, 0.0
        %v2308 = vsel %vm2052, %v773, 0.0
        %v2309 = vsel %vm2053, %v774, 0.0
        %v2310 = vld [vmem:[%s252] sm:$0xf]
        %2311 = vmatpush.msra.mxu0 %v2069
        %2312 = vmatpush.msra.mxu0 %v2068
        %2313 = vmatpush.msra.mxu0 %v2067
        %2314 = vmatpush.msra.mxu0 %v2066
        %2315 = vmatpush.msra.mxu0 %v2065
        %2316 = vmatpush.msra.mxu0 %v2064
        %2317 = vmatpush.msra.mxu0 %v2063
        %2318 = vmatpush.msra.mxu0 %v2062
        %2319 = vmatpush.msra.mxu0 %v2061
        %2320 = vmatpush.msra.mxu0 %v2060
        %2321 = vmatpush.msra.mxu0 %v2059
        %2322 = vmatpush.msra.mxu0 %v2058
        %2323 = vmatpush.msra.mxu0 %v2057
        %2324 = vmatpush.msra.mxu0 %v2056
        %2325 = vmatpush.msra.mxu0 %v2055
        %2326 = vmatpush.msra.mxu0 %v2054
        %2327 = vmatmul.f32.gmra.mxu0 %v466
        %v2328 = vpop.f32.mrf.mxu0
        %v2329 = vadd.f32 0.0, %v2328
        %2330 = vdwg.mxu0
        %2331 = vmatpush.msra.mxu0 %v2085
        %2332 = vmatpush.msra.mxu0 %v2084
        %2333 = vmatpush.msra.mxu0 %v2083
        %2334 = vmatpush.msra.mxu0 %v2082
        %2335 = vmatpush.msra.mxu0 %v2081
        %2336 = vmatpush.msra.mxu0 %v2080
        %2337 = vmatpush.msra.mxu0 %v2079
        %2338 = vmatpush.msra.mxu0 %v2078
        %2339 = vmatpush.msra.mxu0 %v2077
        %2340 = vmatpush.msra.mxu0 %v2076
        %2341 = vmatpush.msra.mxu0 %v2075
        %2342 = vmatpush.msra.mxu0 %v2074
        %2343 = vmatpush.msra.mxu0 %v2073
        %2344 = vmatpush.msra.mxu0 %v2072
        %2345 = vmatpush.msra.mxu0 %v2071
        %2346 = vmatpush.msra.mxu0 %v2070
        %2347 = vmatmul.f32.gmra.mxu0 %v467
        %v2348 = vpop.f32.mrf.mxu0
        %v2349 = vadd.f32 %v2329, %v2348
        %2350 = vdwg.mxu0
        %2351 = vmatpush.msra.mxu0 %v2101
        %2352 = vmatpush.msra.mxu0 %v2100
        %2353 = vmatpush.msra.mxu0 %v2099
        %2354 = vmatpush.msra.mxu0 %v2098
        %2355 = vmatpush.msra.mxu0 %v2097
        %2356 = vmatpush.msra.mxu0 %v2096
        %2357 = vmatpush.msra.mxu0 %v2095
        %2358 = vmatpush.msra.mxu0 %v2094
        %2359 = vmatpush.msra.mxu0 %v2093
        %2360 = vmatpush.msra.mxu0 %v2092
        %2361 = vmatpush.msra.mxu0 %v2091
        %2362 = vmatpush.msra.mxu0 %v2090
        %2363 = vmatpush.msra.mxu0 %v2089
        %2364 = vmatpush.msra.mxu0 %v2088
        %2365 = vmatpush.msra.mxu0 %v2087
        %2366 = vmatpush.msra.mxu0 %v2086
        %2367 = vmatmul.f32.gmra.mxu0 %v468
        %v2368 = vpop.f32.mrf.mxu0
        %v2369 = vadd.f32 %v2349, %v2368
        %2370 = vdwg.mxu0
        %2371 = vmatpush.msra.mxu0 %v2117
        %2372 = vmatpush.msra.mxu0 %v2116
        %2373 = vmatpush.msra.mxu0 %v2115
        %2374 = vmatpush.msra.mxu0 %v2114
        %2375 = vmatpush.msra.mxu0 %v2113
        %2376 = vmatpush.msra.mxu0 %v2112
        %2377 = vmatpush.msra.mxu0 %v2111
        %2378 = vmatpush.msra.mxu0 %v2110
        %2379 = vmatpush.msra.mxu0 %v2109
        %2380 = vmatpush.msra.mxu0 %v2108
        %2381 = vmatpush.msra.mxu0 %v2107
        %2382 = vmatpush.msra.mxu0 %v2106
        %2383 = vmatpush.msra.mxu0 %v2105
        %2384 = vmatpush.msra.mxu0 %v2104
        %2385 = vmatpush.msra.mxu0 %v2103
        %2386 = vmatpush.msra.mxu0 %v2102
        %2387 = vmatmul.f32.gmra.mxu0 %v469
        %v2388 = vpop.f32.mrf.mxu0
        %v2389 = vadd.f32 %v2369, %v2388
        %2390 = vdwg.mxu0
        %2391 = vmatpush.msra.mxu0 %v2133
        %2392 = vmatpush.msra.mxu0 %v2132
        %2393 = vmatpush.msra.mxu0 %v2131
        %2394 = vmatpush.msra.mxu0 %v2130
        %2395 = vmatpush.msra.mxu0 %v2129
        %2396 = vmatpush.msra.mxu0 %v2128
        %2397 = vmatpush.msra.mxu0 %v2127
        %2398 = vmatpush.msra.mxu0 %v2126
        %2399 = vmatpush.msra.mxu0 %v2125
        %2400 = vmatpush.msra.mxu0 %v2124
        %2401 = vmatpush.msra.mxu0 %v2123
        %2402 = vmatpush.msra.mxu0 %v2122
        %2403 = vmatpush.msra.mxu0 %v2121
        %2404 = vmatpush.msra.mxu0 %v2120
        %2405 = vmatpush.msra.mxu0 %v2119
        %2406 = vmatpush.msra.mxu0 %v2118
        %2407 = vmatmul.f32.gmra.mxu0 %v470
        %v2408 = vpop.f32.mrf.mxu0
        %v2409 = vadd.f32 %v2389, %v2408
        %2410 = vdwg.mxu0
        %2411 = vmatpush.msra.mxu0 %v2149
        %2412 = vmatpush.msra.mxu0 %v2148
        %2413 = vmatpush.msra.mxu0 %v2147
        %2414 = vmatpush.msra.mxu0 %v2146
        %2415 = vmatpush.msra.mxu0 %v2145
        %2416 = vmatpush.msra.mxu0 %v2144
        %2417 = vmatpush.msra.mxu0 %v2143
        %2418 = vmatpush.msra.mxu0 %v2142
        %2419 = vmatpush.msra.mxu0 %v2141
        %2420 = vmatpush.msra.mxu0 %v2140
        %2421 = vmatpush.msra.mxu0 %v2139
        %2422 = vmatpush.msra.mxu0 %v2138
        %2423 = vmatpush.msra.mxu0 %v2137
        %2424 = vmatpush.msra.mxu0 %v2136
        %2425 = vmatpush.msra.mxu0 %v2135
        %2426 = vmatpush.msra.mxu0 %v2134
        %2427 = vmatmul.f32.gmra.mxu0 %v471
        %v2428 = vpop.f32.mrf.mxu0
        %v2429 = vadd.f32 %v2409, %v2428
        %2430 = vdwg.mxu0
        %2431 = vmatpush.msra.mxu0 %v2165
        %2432 = vmatpush.msra.mxu0 %v2164
        %2433 = vmatpush.msra.mxu0 %v2163
        %2434 = vmatpush.msra.mxu0 %v2162
        %2435 = vmatpush.msra.mxu0 %v2161
        %2436 = vmatpush.msra.mxu0 %v2160
        %2437 = vmatpush.msra.mxu0 %v2159
        %2438 = vmatpush.msra.mxu0 %v2158
        %2439 = vmatpush.msra.mxu0 %v2157
        %2440 = vmatpush.msra.mxu0 %v2156
        %2441 = vmatpush.msra.mxu0 %v2155
        %2442 = vmatpush.msra.mxu0 %v2154
        %2443 = vmatpush.msra.mxu0 %v2153
        %2444 = vmatpush.msra.mxu0 %v2152
        %2445 = vmatpush.msra.mxu0 %v2151
        %2446 = vmatpush.msra.mxu0 %v2150
        %2447 = vmatmul.f32.gmra.mxu0 %v472
        %v2448 = vpop.f32.mrf.mxu0
        %v2449 = vadd.f32 %v2429, %v2448
        %2450 = vdwg.mxu0
        %2451 = vmatpush.msra.mxu0 %v2181
        %2452 = vmatpush.msra.mxu0 %v2180
        %2453 = vmatpush.msra.mxu0 %v2179
        %2454 = vmatpush.msra.mxu0 %v2178
        %2455 = vmatpush.msra.mxu0 %v2177
        %2456 = vmatpush.msra.mxu0 %v2176
        %2457 = vmatpush.msra.mxu0 %v2175
        %2458 = vmatpush.msra.mxu0 %v2174
        %2459 = vmatpush.msra.mxu0 %v2173
        %2460 = vmatpush.msra.mxu0 %v2172
        %2461 = vmatpush.msra.mxu0 %v2171
        %2462 = vmatpush.msra.mxu0 %v2170
        %2463 = vmatpush.msra.mxu0 %v2169
        %2464 = vmatpush.msra.mxu0 %v2168
        %2465 = vmatpush.msra.mxu0 %v2167
        %2466 = vmatpush.msra.mxu0 %v2166
        %2467 = vmatmul.f32.gmra.mxu0 %v473
        %v2468 = vpop.f32.mrf.mxu0
        %v2469 = vadd.f32 %v2449, %v2468
        %2470 = vdwg.mxu0
        %2471 = vmatpush.msra.mxu0 %v2197
        %2472 = vmatpush.msra.mxu0 %v2196
        %2473 = vmatpush.msra.mxu0 %v2195
        %2474 = vmatpush.msra.mxu0 %v2194
        %2475 = vmatpush.msra.mxu0 %v2193
        %2476 = vmatpush.msra.mxu0 %v2192
        %2477 = vmatpush.msra.mxu0 %v2191
        %2478 = vmatpush.msra.mxu0 %v2190
        %2479 = vmatpush.msra.mxu0 %v2189
        %2480 = vmatpush.msra.mxu0 %v2188
        %2481 = vmatpush.msra.mxu0 %v2187
        %2482 = vmatpush.msra.mxu0 %v2186
        %2483 = vmatpush.msra.mxu0 %v2185
        %2484 = vmatpush.msra.mxu0 %v2184
        %2485 = vmatpush.msra.mxu0 %v2183
        %2486 = vmatpush.msra.mxu0 %v2182
        %2487 = vmatmul.f32.gmra.mxu0 %v474
        %v2488 = vpop.f32.mrf.mxu0
        %v2489 = vadd.f32 %v2469, %v2488
        %2490 = vdwg.mxu0
        %2491 = vmatpush.msra.mxu0 %v2213
        %2492 = vmatpush.msra.mxu0 %v2212
        %2493 = vmatpush.msra.mxu0 %v2211
        %2494 = vmatpush.msra.mxu0 %v2210
        %2495 = vmatpush.msra.mxu0 %v2209
        %2496 = vmatpush.msra.mxu0 %v2208
        %2497 = vmatpush.msra.mxu0 %v2207
        %2498 = vmatpush.msra.mxu0 %v2206
        %2499 = vmatpush.msra.mxu0 %v2205
        %2500 = vmatpush.msra.mxu0 %v2204
        %2501 = vmatpush.msra.mxu0 %v2203
        %2502 = vmatpush.msra.mxu0 %v2202
        %2503 = vmatpush.msra.mxu0 %v2201
        %2504 = vmatpush.msra.mxu0 %v2200
        %2505 = vmatpush.msra.mxu0 %v2199
        %2506 = vmatpush.msra.mxu0 %v2198
        %2507 = vmatmul.f32.gmra.mxu0 %v475
        %v2508 = vpop.f32.mrf.mxu0
        %v2509 = vadd.f32 %v2489, %v2508
        %2510 = vdwg.mxu0
        %2511 = vmatpush.msra.mxu0 %v2229
        %2512 = vmatpush.msra.mxu0 %v2228
        %2513 = vmatpush.msra.mxu0 %v2227
        %2514 = vmatpush.msra.mxu0 %v2226
        %2515 = vmatpush.msra.mxu0 %v2225
        %2516 = vmatpush.msra.mxu0 %v2224
        %2517 = vmatpush.msra.mxu0 %v2223
        %2518 = vmatpush.msra.mxu0 %v2222
        %2519 = vmatpush.msra.mxu0 %v2221
        %2520 = vmatpush.msra.mxu0 %v2220
        %2521 = vmatpush.msra.mxu0 %v2219
        %2522 = vmatpush.msra.mxu0 %v2218
        %2523 = vmatpush.msra.mxu0 %v2217
        %2524 = vmatpush.msra.mxu0 %v2216
        %2525 = vmatpush.msra.mxu0 %v2215
        %2526 = vmatpush.msra.mxu0 %v2214
        %2527 = vmatmul.f32.gmra.mxu0 %v476
        %v2528 = vpop.f32.mrf.mxu0
        %v2529 = vadd.f32 %v2509, %v2528
        %2530 = vdwg.mxu0
        %2531 = vmatpush.msra.mxu0 %v2245
        %2532 = vmatpush.msra.mxu0 %v2244
        %2533 = vmatpush.msra.mxu0 %v2243
        %2534 = vmatpush.msra.mxu0 %v2242
        %2535 = vmatpush.msra.mxu0 %v2241
        %2536 = vmatpush.msra.mxu0 %v2240
        %2537 = vmatpush.msra.mxu0 %v2239
        %2538 = vmatpush.msra.mxu0 %v2238
        %2539 = vmatpush.msra.mxu0 %v2237
        %2540 = vmatpush.msra.mxu0 %v2236
        %2541 = vmatpush.msra.mxu0 %v2235
        %2542 = vmatpush.msra.mxu0 %v2234
        %2543 = vmatpush.msra.mxu0 %v2233
        %2544 = vmatpush.msra.mxu0 %v2232
        %2545 = vmatpush.msra.mxu0 %v2231
        %2546 = vmatpush.msra.mxu0 %v2230
        %2547 = vmatmul.f32.gmra.mxu0 %v477
        %v2548 = vpop.f32.mrf.mxu0
        %v2549 = vadd.f32 %v2529, %v2548
        %2550 = vdwg.mxu0
        %2551 = vmatpush.msra.mxu0 %v2261
        %2552 = vmatpush.msra.mxu0 %v2260
        %2553 = vmatpush.msra.mxu0 %v2259
        %2554 = vmatpush.msra.mxu0 %v2258
        %2555 = vmatpush.msra.mxu0 %v2257
        %2556 = vmatpush.msra.mxu0 %v2256
        %2557 = vmatpush.msra.mxu0 %v2255
        %2558 = vmatpush.msra.mxu0 %v2254
        %2559 = vmatpush.msra.mxu0 %v2253
        %2560 = vmatpush.msra.mxu0 %v2252
        %2561 = vmatpush.msra.mxu0 %v2251
        %2562 = vmatpush.msra.mxu0 %v2250
        %2563 = vmatpush.msra.mxu0 %v2249
        %2564 = vmatpush.msra.mxu0 %v2248
        %2565 = vmatpush.msra.mxu0 %v2247
        %2566 = vmatpush.msra.mxu0 %v2246
        %2567 = vmatmul.f32.gmra.mxu0 %v478
        %v2568 = vpop.f32.mrf.mxu0
        %v2569 = vadd.f32 %v2549, %v2568
        %2570 = vdwg.mxu0
        %2571 = vmatpush.msra.mxu0 %v2277
        %2572 = vmatpush.msra.mxu0 %v2276
        %2573 = vmatpush.msra.mxu0 %v2275
        %2574 = vmatpush.msra.mxu0 %v2274
        %2575 = vmatpush.msra.mxu0 %v2273
        %2576 = vmatpush.msra.mxu0 %v2272
        %2577 = vmatpush.msra.mxu0 %v2271
        %2578 = vmatpush.msra.mxu0 %v2270
        %2579 = vmatpush.msra.mxu0 %v2269
        %2580 = vmatpush.msra.mxu0 %v2268
        %2581 = vmatpush.msra.mxu0 %v2267
        %2582 = vmatpush.msra.mxu0 %v2266
        %2583 = vmatpush.msra.mxu0 %v2265
        %2584 = vmatpush.msra.mxu0 %v2264
        %2585 = vmatpush.msra.mxu0 %v2263
        %2586 = vmatpush.msra.mxu0 %v2262
        %2587 = vmatmul.f32.gmra.mxu0 %v479
        %v2588 = vpop.f32.mrf.mxu0
        %v2589 = vadd.f32 %v2569, %v2588
        %2590 = vdwg.mxu0
        %2591 = vmatpush.msra.mxu0 %v2293
        %2592 = vmatpush.msra.mxu0 %v2292
        %2593 = vmatpush.msra.mxu0 %v2291
        %2594 = vmatpush.msra.mxu0 %v2290
        %2595 = vmatpush.msra.mxu0 %v2289
        %2596 = vmatpush.msra.mxu0 %v2288
        %2597 = vmatpush.msra.mxu0 %v2287
        %2598 = vmatpush.msra.mxu0 %v2286
        %2599 = vmatpush.msra.mxu0 %v2285
        %2600 = vmatpush.msra.mxu0 %v2284
        %2601 = vmatpush.msra.mxu0 %v2283
        %2602 = vmatpush.msra.mxu0 %v2282
        %2603 = vmatpush.msra.mxu0 %v2281
        %2604 = vmatpush.msra.mxu0 %v2280
        %2605 = vmatpush.msra.mxu0 %v2279
        %2606 = vmatpush.msra.mxu0 %v2278
        %2607 = vmatmul.f32.gmra.mxu0 %v480
        %v2608 = vpop.f32.mrf.mxu0
        %v2609 = vadd.f32 %v2589, %v2608
        %2610 = vdwg.mxu0
        %2611 = vmatpush.msra.mxu0 %v2309
        %2612 = vmatpush.msra.mxu0 %v2308
        %2613 = vmatpush.msra.mxu0 %v2307
        %2614 = vmatpush.msra.mxu0 %v2306
        %2615 = vmatpush.msra.mxu0 %v2305
        %2616 = vmatpush.msra.mxu0 %v2304
        %2617 = vmatpush.msra.mxu0 %v2303
        %2618 = vmatpush.msra.mxu0 %v2302
        %2619 = vmatpush.msra.mxu0 %v2301
        %2620 = vmatpush.msra.mxu0 %v2300
        %2621 = vmatpush.msra.mxu0 %v2299
        %2622 = vmatpush.msra.mxu0 %v2298
        %2623 = vmatpush.msra.mxu0 %v2297
        %2624 = vmatpush.msra.mxu0 %v2296
        %2625 = vmatpush.msra.mxu0 %v2295
        %2626 = vmatpush.msra.mxu0 %v2294
        %2627 = vmatmul.f32.gmra.mxu0 %v481
        %v2628 = vpop.f32.mrf.mxu0
        %v2629 = vadd.f32 %v2609, %v2628
        %2630 = vdwg.mxu0
        %v2631 = vadd.f32 %v2310, %v2629
        %vm2632 = vcmask 125952
        %2633 = vst.msk [vmem:[%s252] sm:$0xf] %vm2632, %v2631
        %s2634 = sand.u32 %s106, 1
        %s2635 = scalar_lea.sflag [#allocation3], %s2634
        %s2636 = sand.u32 %s106, 1
        %s2637 = smul.addr %s2636, 4
        %s2638 = scalar_lea.vmem [#allocation2], %s2637
        %p2639 = scmp.lt.s32.totalorder %s22, 1
        %s2640 = scalar_select %p2639, %s22, 1
        %s2641 = smul.addr %s2640, 4
        %s2642 = scalar_lea.vmem %s3, %s2641
        // Predicated region
        $region33: #{tpu_custom_call.1} parent=27 // pred_check
          %p2643 = pneg %p116
        $region34: #{tpu_custom_call.1} parent=27 // pred_check_branch
          %2645 = sbr.rel (%p2643) target = $region36
        $region35: #{tpu_custom_call.1} parent=27 // pred_region
          %2647 = vsyncadd %s2635, 0
          %s2648 = smul.addr %s22, 4
          %s2649 = scalar_lea.hbm %s2, %s2648
          %s2651 = sshll.u32 %s2638, 4
          %s2652 = int_to_ptr.vmem [resolvable:$true] %s2651
          %s2653 = sshll.u32 %s2649, 4
          %s2654 = int_to_ptr.hbm [resolvable:$true] %s2653
          %2656 = dma.vmem_to_hbm [thread:$0]  %s2652, 64, %s2654, %s2635
        $region36: #{tpu_custom_call.1} parent=27 // pred_fallthru
          _
        // Predicated region
        $region37: #{tpu_custom_call.1} parent=27 // pred_check
          %p2657 = pneg %p142
        $region38: #{tpu_custom_call.1} parent=27 // pred_check_branch
          %2659 = sbr.rel (%p2657) target = $region40
        $region39: #{tpu_custom_call.1} parent=27 // pred_region
          _
        $region40: #{tpu_custom_call.1} parent=27 // pred_fallthru
          _
      $region28: #{tpu_custom_call.1} parent=5 // pred_fallthru
        _
      %p2660 = scmp.le.s32.totalorder 2, %s13
      // Predicated region
      $region41: #{tpu_custom_call.1} parent=5 // pred_check
        %p2661 = pneg %p2660
      $region42: #{tpu_custom_call.1} parent=5 // pred_check_branch
        %2663 = sbr.rel (%p2661) target = $region44
      $region43: #{tpu_custom_call.1} parent=5 // pred_region
        %s2664 = ssub.s32 %s13, 2
        // Predicated region
        $region45: #{tpu_custom_call.1} parent=43 // pred_check
          %p2665 = pneg %p122
        $region46: #{tpu_custom_call.1} parent=43 // pred_check_branch
          %2667 = sbr.rel (%p2665) target = $region48
        $region47: #{tpu_custom_call.1} parent=43 // pred_region
          %s2668 = sand.u32 %s107, 1
          %s2669 = scalar_lea.sflag [#allocation3], %s2668
          %s2670 = sand.u32 %s107, 1
          %s2671 = smul.addr %s2670, 4
          %s2672 = scalar_lea.vmem [#allocation2], %s2671
          %2674 = dma.done %s2669, 64
        $region48: #{tpu_custom_call.1} parent=43 // pred_fallthru
          _
        // Predicated region
        $region49: #{tpu_custom_call.1} parent=43 // pred_check
          %p2675 = pneg %p148
        $region50: #{tpu_custom_call.1} parent=43 // pred_check_branch
          %2677 = sbr.rel (%p2675) target = $region52
        $region51: #{tpu_custom_call.1} parent=43 // pred_region
          %p2678 = scmp.lt.s32.totalorder %s24, 1
          %s2679 = scalar_select %p2678, %s24, 1
          %s2680 = smul.addr %s2679, 4
          %s2681 = scalar_lea.vmem %s3, %s2680
        $region52: #{tpu_custom_call.1} parent=43 // pred_fallthru
          _
      $region44: #{tpu_custom_call.1} parent=5 // pred_fallthru
        _
    $region6: #{tpu_custom_call.1} parent=1 // loop_footer
      %s17 = sadd.s32 1, %s13
    $region7: #{tpu_custom_call.1} parent=1 // loop_footer_branch
      %12 = sbr.rel target = $region3
    $region8: #{tpu_custom_call.1} parent=1 // loop_exit
      _
    %2682 = vsyncpa [#allocation3], 1
    %s2683 = scalar_lea.sflag [#allocation3], 1
    %2684 = vsyncpa %s2683, 1

</llo_original>
